<compile_context>
chip_gen: v7x
topology: tpu7x:2x2x1
jax: 0.10.0
libtpu: 0.0.40
codegen_flags: <defaults>
</compile_context>

<pallas_src>
import jax
import jax.numpy as jnp
from jax.experimental import pallas as pl
from jax.experimental.pallas import tpu as pltpu


def residual_block_kernel(x_mm_ref, w_ref, b_ref, x_res_ref, o_ref, acc_ref):
    """Grid = (i: batch tiles, j: out-feature tiles, k: in-feature tiles).

    x_mm_ref : (tm, tk) bf16  x tile for the matmul (K block k)
    w_ref    : (tk, tn) bf16  weight tile, pre-transposed (in, out) layout
    b_ref    : (1, tn)  f32   bias tile
    x_res_ref: (tm, tn) f32   x tile for the residual add (N block j)
    o_ref    : (tm, tn)       output tile
    acc_ref  : (tm, tn) f32   VMEM accumulator scratch
    """
    k = pl.program_id(2)

    @pl.when(k == 0)
    def _():
        acc_ref[...] = jnp.zeros_like(acc_ref)

    # Plain (tm, tk) @ (tk, tn) on the MXU, f32 accumulation. Both operands are
    # already bf16 (cast once in the wrapper), so no in-kernel VPU pack.
    acc_ref[...] += jnp.dot(
        x_mm_ref[...], w_ref[...], preferred_element_type=jnp.float32
    )

    # Epilogue only once the K reduction is complete.
    @pl.when(k == pl.num_programs(2) - 1)
    def _():
        y = jnp.maximum(acc_ref[...] + b_ref[...], 0.0)   # bias + ReLU (f32)
        o_ref[...] = (x_res_ref[...] + y).astype(o_ref.dtype)


def _vmem_capacity_bytes():
    """Physical VMEM of the local chip; conservative (v7x) fallback."""
    try:
        return int(pltpu.get_tpu_info().vmem_capacity_bytes)
    except Exception:
        return 64 << 20


def _pick_tile(dim, candidates):
    """Largest candidate that evenly divides `dim`, else the full dim
    (a full-extent block is always a legal block shape)."""
    for c in candidates:
        if dim % c == 0:
            return c
    # TODO(synk): pad ragged dims instead of falling back to a full-dim block.
    return dim


def _vmem_bytes(tm, tn, tk):
    """Double-buffered inputs/outputs + accumulator footprint."""
    return (2 * tm * tk * 2        # x matmul tiles (bf16)
            + 2 * tk * tn * 2      # weight tiles (bf16)
            + 2 * tn * 4           # bias tiles (f32)
            + 2 * tm * tn * 4      # x residual tiles (f32)
            + 2 * tm * tn * 4      # output tiles (f32)
            + tm * tn * 4)         # accumulator (f32)


def _choose_tiles(B, D, vmem_cap):
    big_vmem = vmem_cap >= (100 << 20)          # v5e / v6e: 128 MiB physical
    if big_vmem:
        tm_c, tn_c, tk_c = (512, 256, 128), (512, 256, 128), (1024, 512, 256, 128)
        budget = int(0.55 * vmem_cap)
    else:                                        # v7x: 64 MiB per TC — stay tight
        tm_c, tn_c, tk_c = (256, 128), (256, 128), (512, 256, 128)
        budget = int(0.45 * vmem_cap)

    tm = _pick_tile(B, tm_c)
    tn = _pick_tile(D, tn_c)
    tk = _pick_tile(D, tk_c)

    def _shrinkable(t, dim, align):
        h = t // 2
        return t % 2 == 0 and h >= align and h % align == 0 and dim % h == 0

    # Keep the double-buffered footprint within budget (matters on the ragged-D
    # full-dim fallback and on v7x's 64 MiB VMEM).
    while _vmem_bytes(tm, tn, tk) > budget:
        if _shrinkable(tk, D, 128):
            tk //= 2
        elif _shrinkable(tn, D, 128):
            tn //= 2
        elif _shrinkable(tm, B, 8):
            tm //= 2
        else:
            break

    # Megacore guard: want >= 2 parallel grid steps so both TensorCores work.
    while (B // tm) * (D // tn) < 2 and _shrinkable(tm, B, 8):
        tm //= 2

    return tm, tn, tk


def residual_block(x, weight, bias, *, tile_b=None, tile_n=None, tile_k=None):
    """x: (B, D) f32; weight: (D, D) PyTorch (out, in) layout; bias: (D,)."""
    B, D = x.shape
    assert weight.shape == (D, D) and bias.shape == (D,)

    vmem_cap = _vmem_capacity_bytes()
    tm_d, tn_d, tk_d = _choose_tiles(B, D, vmem_cap)
    tm = tile_b if tile_b is not None else tm_d
    tn = tile_n if tile_n is not None else tn_d
    tk = tile_k if tile_k is not None else tk_d
    assert B % tm == 0 and D % tn == 0 and D % tk == 0

    # One-off wrapper-side layout/dtype prep (in production these should live
    # in HBM in this form already):
    #   * x cast to bf16 for the matmul operand (f32 x kept for the residual),
    #   * weight transposed to (in, out) and cast to bf16,
    #   * bias reshaped to a (1, D) lane-dense row.
    x_bf16 = x.astype(jnp.bfloat16)
    w_t_bf16 = weight.T.astype(jnp.bfloat16)
    b2 = bias.reshape(1, D).astype(jnp.float32)

    grid = (B // tm, D // tn, D // tk)

    vmem_est = _vmem_bytes(tm, tn, tk)
    cap = (100 << 20) if vmem_cap >= (100 << 20) else (48 << 20)
    vmem_limit = min(max(int(1.3 * vmem_est), 8 << 20), cap)

    return pl.pallas_call(
        residual_block_kernel,
        out_shape=jax.ShapeDtypeStruct((B, D), x.dtype),
        grid_spec=pltpu.PrefetchScalarGridSpec(
            num_scalar_prefetch=0,
            grid=grid,
            in_specs=[
                pl.BlockSpec((tm, tk), lambda i, j, k: (i, k)),   # x (bf16, matmul)
                pl.BlockSpec((tk, tn), lambda i, j, k: (k, j)),   # W.T (bf16)
                pl.BlockSpec((1, tn), lambda i, j, k: (0, j)),    # bias
                pl.BlockSpec((tm, tn), lambda i, j, k: (i, j)),   # x (f32, residual)
            ],
            out_specs=pl.BlockSpec((tm, tn), lambda i, j, k: (i, j)),
            scratch_shapes=[pltpu.VMEM((tm, tn), jnp.float32)],
        ),
        compiler_params=pltpu.CompilerParams(
            dimension_semantics=("parallel", "parallel", "arbitrary"),
            vmem_limit_bytes=vmem_limit,
        ),
    )(x_bf16, w_t_bf16, b2, x)


if __name__ == "__main__":
    key = jax.random.PRNGKey(0)
    # Small but lane-dense demo shape: D a multiple of 128 (full MXU lanes),
    # B large enough for >1 parallel batch tile (megacore sharding on v7x).
    B, D = 512, 256

    kx, kw, kb = jax.random.split(key, 3)
    x = jax.random.normal(kx, (B, D), dtype=jnp.float32)
    # PyTorch nn.Linear-style init: W (out, in), b (out,)
    bound = 1.0 / (D ** 0.5)
    weight = jax.random.uniform(kw, (D, D), minval=-bound, maxval=bound,
                                dtype=jnp.float32)
    bias = jax.random.uniform(kb, (D,), minval=-bound, maxval=bound,
                              dtype=jnp.float32)

    out = residual_block(x, weight, bias)
    out = jax.block_until_ready(out)

    # Reference in plain JAX (f32). bf16 matmul operands -> relaxed tolerance.
    ref = x + jnp.maximum(x @ weight.T + bias, 0.0)
    assert out.shape == ref.shape
    assert jnp.allclose(out, ref, atol=3e-2, rtol=3e-2), "mismatch vs reference"

    print("KERNEL_OK")
</pallas_src>

<mosaic_0001>
module attributes {stable_mosaic.version = 11 : i64} {
  func.func @residual_block_kernel(%arg0: i32, %arg1: i32, %arg2: i32, %arg3: memref<256x256xbf16, #tpu.memory_space<vmem>>, %arg4: memref<256x256xbf16, #tpu.memory_space<vmem>>, %arg5: memref<1x256xf32, #tpu.memory_space<vmem>>, %arg6: memref<256x256xf32, #tpu.memory_space<vmem>>, %arg7: memref<256x256xf32, #tpu.memory_space<vmem>>, %arg8: memref<256x256xf32, #tpu.memory_space<vmem>>) attributes {dimension_semantics = [#tpu.dimension_semantics<parallel>, #tpu.dimension_semantics<parallel>, #tpu.dimension_semantics<arbitrary>], iteration_bounds = array<i64: 2, 1, 1>, scalar_prefetch = 0 : i64, scratch_operands = 1 : i64, tpu.core_type = #tpu.core_type<tc>, window_params = [{transform_indices = @transform_0, window_bounds = array<i64: 256, 256>}, {transform_indices = @transform_1, window_bounds = array<i64: 256, 256>}, {transform_indices = @transform_2, window_bounds = array<i64: 1, 256>}, {transform_indices = @transform_3, window_bounds = array<i64: 256, 256>}, {transform_indices = @transform_4, window_bounds = array<i64: 256, 256>}]} {
    %c0_i32 = arith.constant 0 : i32
    %0 = arith.cmpi eq, %arg2, %c0_i32 : i32
    %1 = arith.extui %0 : i1 to i32
    %c0_i32_0 = arith.constant 0 : i32
    %2 = arith.cmpi ne, %1, %c0_i32_0 : i32
    scf.if %2 {
      %cst_10 = arith.constant 0.000000e+00 : f32
      %12 = vector.broadcast %cst_10 : f32 to vector<256x256xf32>
      %c0_11 = arith.constant 0 : index
      %c0_12 = arith.constant 0 : index
      %13 = vector.load %arg8[%c0_11, %c0_12] : memref<256x256xf32, #tpu.memory_space<vmem>>, vector<256x256xf32>
      tpu.vector_store %arg8[%c0_11, %c0_12], %12 {strides = array<i32>} : memref<256x256xf32, #tpu.memory_space<vmem>>, vector<256x256xf32>,
    } else {
    }
    %c0 = arith.constant 0 : index
    %c0_1 = arith.constant 0 : index
    %3 = vector.load %arg8[%c0, %c0_1] : memref<256x256xf32, #tpu.memory_space<vmem>>, vector<256x256xf32>
    %c0_2 = arith.constant 0 : index
    %c0_3 = arith.constant 0 : index
    %4 = vector.load %arg3[%c0_2, %c0_3] : memref<256x256xbf16, #tpu.memory_space<vmem>>, vector<256x256xbf16>
    %c0_4 = arith.constant 0 : index
    %c0_5 = arith.constant 0 : index
    %5 = vector.load %arg4[%c0_4, %c0_5] : memref<256x256xbf16, #tpu.memory_space<vmem>>, vector<256x256xbf16>
    %cst = arith.constant dense<0.000000e+00> : vector<256x256xf32>
    %6 = tpu.matmul %4, %5, %cst {dimension_numbers = #tpu.dot_dimension_numbers<[1], [0], [0], [1], [0, 0, 1, 1], [], []>} : vector<256x256xbf16>, vector<256x256xbf16>, vector<256x256xf32> -> vector<256x256xf32>
    %7 = arith.addf %3, %6 : vector<256x256xf32>
    %c0_6 = arith.constant 0 : index
    %c0_7 = arith.constant 0 : index
    %8 = vector.load %arg8[%c0_6, %c0_7] : memref<256x256xf32, #tpu.memory_space<vmem>>, vector<256x256xf32>
    tpu.vector_store %arg8[%c0_6, %c0_7], %7 {strides = array<i32>} : memref<256x256xf32, #tpu.memory_space<vmem>>, vector<256x256xf32>,
    %c0_i32_8 = arith.constant 0 : i32
    %9 = arith.cmpi eq, %arg2, %c0_i32_8 : i32
    %10 = arith.extui %9 : i1 to i32
    %c0_i32_9 = arith.constant 0 : i32
    %11 = arith.cmpi ne, %10, %c0_i32_9 : i32
    scf.if %11 {
      %c0_10 = arith.constant 0 : index
      %c0_11 = arith.constant 0 : index
      %12 = vector.load %arg8[%c0_10, %c0_11] : memref<256x256xf32, #tpu.memory_space<vmem>>, vector<256x256xf32>
      %c0_12 = arith.constant 0 : index
      %c0_13 = arith.constant 0 : index
      %13 = vector.load %arg5[%c0_12, %c0_13] : memref<1x256xf32, #tpu.memory_space<vmem>>, vector<1x256xf32>
      %14 = vector.broadcast %13 : vector<1x256xf32> to vector<256x256xf32>
      %15 = arith.addf %12, %14 : vector<256x256xf32>
      %cst_14 = arith.constant 0.000000e+00 : f32
      %16 = vector.broadcast %cst_14 : f32 to vector<256x256xf32>
      %17 = arith.maximumf %15, %16 : vector<256x256xf32>
      %c0_15 = arith.constant 0 : index
      %c0_16 = arith.constant 0 : index
      %18 = vector.load %arg6[%c0_15, %c0_16] : memref<256x256xf32, #tpu.memory_space<vmem>>, vector<256x256xf32>
      %19 = arith.addf %18, %17 : vector<256x256xf32>
      %c0_17 = arith.constant 0 : index
      %c0_18 = arith.constant 0 : index
      %20 = vector.load %arg7[%c0_17, %c0_18] : memref<256x256xf32, #tpu.memory_space<vmem>>, vector<256x256xf32>
      tpu.vector_store %arg7[%c0_17, %c0_18], %19 {strides = array<i32>} : memref<256x256xf32, #tpu.memory_space<vmem>>, vector<256x256xf32>,
    } else {
    }
    return
  }
  func.func @transform_0(%arg0: i32, %arg1: i32, %arg2: i32) -> (i32, i32) {
    %c0_i32 = arith.constant 0 : i32
    return %arg0, %arg2 : i32, i32
  }
  func.func @transform_1(%arg0: i32, %arg1: i32, %arg2: i32) -> (i32, i32) {
    %c0_i32 = arith.constant 0 : i32
    return %arg2, %arg1 : i32, i32
  }
  func.func @transform_2(%arg0: i32, %arg1: i32, %arg2: i32) -> (i32, i32) {
    %c0_i32 = arith.constant 0 : i32
    %c0_i32_0 = arith.constant 0 : i32
    return %c0_i32, %arg1 : i32, i32
  }
  func.func @transform_3(%arg0: i32, %arg1: i32, %arg2: i32) -> (i32, i32) {
    %c0_i32 = arith.constant 0 : i32
    return %arg0, %arg1 : i32, i32
  }
  func.func @transform_4(%arg0: i32, %arg1: i32, %arg2: i32) -> (i32, i32) {
    %c0_i32 = arith.constant 0 : i32
    return %arg0, %arg1 : i32, i32
  }
}

</mosaic_0001>

<llo_original>
// kernel: tpu_custom_call.1
$region0: #{tpu_custom_call.1}
  #allocation0 [shape = 'u32[]', space=smem, size = 0x4, offset = 0x4, fixed_abs, tag = 'smem constant byte address 0x4 - core index']
  #allocation1 [shape = 'u32[144,128]{1,0:T(1,128)}', space=vmem, size = 0x12000, scoped, tag = 'internal scratch']
  #allocation2 [shape = 'f32[256,256]{1,0:T(8,128)}', space=vmem, size = 0x40000, scoped, tag = 'scratch operand']
  %s0 = inlined_call_operand.hbm [shape: bf16[512,256], index: 0, kind: input, shape index: {}]
  %s1 = inlined_call_operand.hbm [shape: bf16[256,256], index: 1, kind: input, shape index: {}]
  %s2 = inlined_call_operand.vmem [shape: f32[1,256], index: 2, kind: input, shape index: {}]
  %s3 = inlined_call_operand.hbm [shape: f32[512,256], index: 3, kind: input, shape index: {}]
  %s4 = inlined_call_operand.hbm [shape: f32[512,256], index: 4, kind: output, shape index: {}]
  %s5 = sld [smem:[#allocation0]]
  $region69: #{tpu_custom_call.1} parent=0
    _
  %s7 = ssub.s32 1, %s5
  %s8 = scalar_select 0, %s7, %s5
  $region1: #{tpu_custom_call.1} parent=0
    #allocation3 [shape = 'u8[262144]{0}', space=vmem, size = 0x40000, scoped, tag = 'input window, operand 0']
    #allocation4 [shape = 's32[2]{0}', space=sflag, size = 0x8, scoped, tag = 'scoped memory for tpu_custom_call.1']
    #allocation5 [shape = 's32[2]{0}', space=sflag, size = 0x8, scoped, tag = 'scoped memory for tpu_custom_call.1']
    #allocation6 [shape = 'u8[131072]{0}', space=vmem, size = 0x20000, scoped, tag = 'input window, operand 1, single buffered']
    #allocation7 [shape = 's32[1]{0}', space=sflag, size = 0x4, scoped, tag = 'scoped memory for tpu_custom_call.1']
    #allocation8 [shape = 'u8[524288]{0}', space=vmem, size = 0x80000, scoped, tag = 'input window, operand 3']
    #allocation9 [shape = 'u8[524288]{0}', space=vmem, size = 0x80000, scoped, tag = 'output window, operand 0']
    %9 = vsyncpa [#allocation4], 0
    %s10 = scalar_lea.sflag [#allocation4], 1
    %11 = vsyncpa %s10, 0
    %12 = vsyncpa [#allocation7], 0
    %13 = vsyncpa [#allocation5], 0
    %s14 = scalar_lea.sflag [#allocation5], 1
    %15 = vsyncpa %s14, 0
    loop: start=0, step=1, limit=4
    $region2: #{tpu_custom_call.1} parent=1 // loop_pre_header
      _
    $region3: #{tpu_custom_call.1} parent=1 // loop_header
      %s17 = sphi 0, %s21
      %p18 = scmp.ge.s32.totalorder %s17, 4
      %s24 = sphi 0, %s43
      %s25 = sphi 0, %s39
      %s26 = sphi 0, %s35
      %s27 = sphi 0, %s24
      %s28 = sphi 0, %s25
      %s29 = sphi 0, %s26
      %s30 = sphi 0, %s27
      %s31 = sphi 0, %s28
      %s32 = sphi 0, %s29
      %s48 = sphi 0, %s50
      %s51 = sphi 0, %s48
      %s52 = sphi 0, %s51
      %s68 = sphi 0, %s52
      %s76 = sphi 0, %s78
      %s79 = sphi 0, %s76
      %s80 = sphi 0, %s79
      %s96 = sphi 0, %s80
      %s102 = sphi 0, %s104
      %s105 = sphi 0, %s102
      %s106 = sphi 0, %s105
      %s122 = sphi 0, %s106
      %s130 = sphi 0, %s132
      %s133 = sphi 0, %s130
      %s134 = sphi 0, %s133
      %s150 = sphi 0, %s134
      %s158 = sphi 0, %s160
      %s161 = sphi 0, %s158
      %s162 = sphi 0, %s161
      %s178 = sphi 0, %s162
    $region4: #{tpu_custom_call.1} parent=1 // loop_header_branch
      %20 = sbr.rel (%p18) target = $region8
    $region5: #{tpu_custom_call.1} parent=1 // loop_body
      %s22 = ssub.s32 %s17, 1
      %s23 = ssub.s32 %s17, 2
      %s33 = sadd.s32 1, %s26
      %p34 = scmp.ge.s32.totalorder %s33, 1
      %s35 = scalar_select %p34, 0, %s33
      %s36 = sadd.s32 1, %s25
      %s37 = scalar_select %p34, %s36, %s25
      %p38 = scmp.ge.s32.totalorder %s37, 1
      %s39 = scalar_select %p38, 0, %s37
      %s40 = sadd.s32 1, %s24
      %s41 = scalar_select %p38, %s40, %s24
      %p42 = scmp.ge.s32.totalorder %s41, 2
      %s43 = scalar_select %p42, 0, %s41
      %s44 = ssub.s32 %s24, %s43
      %s45 = ssub.s32 %s26, %s35
      %s46 = sor.u32 %s44, %s45
      %p47 = scmp.eq.s32.totalorder %s46, 0
      %s49 = sadd.s32 %s48, 1
      %s50 = scalar_select %p47, %s48, %s49
      %p53 = pneg %p47
      %p54 = scmp.eq.s32.totalorder %s17, 1
      %p55 = por %p53, %p54
      %p56 = scmp.ne.s32.totalorder %s48, %s51
      %p57 = scmp.eq.s32.totalorder %s17, 0
      %p58 = por %p56, %p57
      %p59 = scmp.ne.s32.totalorder %s48, %s51
      %p60 = scmp.eq.s32.totalorder %s22, 1
      %p61 = por %p59, %p60
      %p62 = scmp.ne.s32.totalorder %s51, %s52
      %p63 = scmp.eq.s32.totalorder %s22, 0
      %p64 = por %p62, %p63
      %p65 = scmp.ne.s32.totalorder %s51, %s52
      %p66 = scmp.eq.s32.totalorder %s23, 1
      %p67 = por %p65, %p66
      %p69 = scmp.ne.s32.totalorder %s52, %s68
      %p70 = scmp.eq.s32.totalorder %s23, 0
      %p71 = por %p69, %p70
      %s72 = ssub.s32 %s26, %s35
      %s73 = ssub.s32 %s25, %s39
      %s74 = sor.u32 %s72, %s73
      %p75 = scmp.eq.s32.totalorder %s74, 0
      %s77 = sadd.s32 %s76, 1
      %s78 = scalar_select %p75, %s76, %s77
      %p81 = pneg %p75
      %p82 = scmp.eq.s32.totalorder %s17, 1
      %p83 = por %p81, %p82
      %p84 = scmp.ne.s32.totalorder %s76, %s79
      %p85 = scmp.eq.s32.totalorder %s17, 0
      %p86 = por %p84, %p85
      %p87 = scmp.ne.s32.totalorder %s76, %s79
      %p88 = scmp.eq.s32.totalorder %s22, 1
      %p89 = por %p87, %p88
      %p90 = scmp.ne.s32.totalorder %s79, %s80
      %p91 = scmp.eq.s32.totalorder %s22, 0
      %p92 = por %p90, %p91
      %p93 = scmp.ne.s32.totalorder %s79, %s80
      %p94 = scmp.eq.s32.totalorder %s23, 1
      %p95 = por %p93, %p94
      %p97 = scmp.ne.s32.totalorder %s80, %s96
      %p98 = scmp.eq.s32.totalorder %s23, 0
      %p99 = por %p97, %p98
      %s100 = ssub.s32 %s25, %s39
      %p101 = scmp.eq.s32.totalorder %s100, 0
      %s103 = sadd.s32 %s102, 1
      %s104 = scalar_select %p101, %s102, %s103
      %p107 = pneg %p101
      %p108 = scmp.eq.s32.totalorder %s17, 1
      %p109 = por %p107, %p108
      %p110 = scmp.ne.s32.totalorder %s102, %s105
      %p111 = scmp.eq.s32.totalorder %s17, 0
      %p112 = por %p110, %p111
      %p113 = scmp.ne.s32.totalorder %s102, %s105
      %p114 = scmp.eq.s32.totalorder %s22, 1
      %p115 = por %p113, %p114
      %p116 = scmp.ne.s32.totalorder %s105, %s106
      %p117 = scmp.eq.s32.totalorder %s22, 0
      %p118 = por %p116, %p117
      %p119 = scmp.ne.s32.totalorder %s105, %s106
      %p120 = scmp.eq.s32.totalorder %s23, 1
      %p121 = por %p119, %p120
      %p123 = scmp.ne.s32.totalorder %s106, %s122
      %p124 = scmp.eq.s32.totalorder %s23, 0
      %p125 = por %p123, %p124
      %s126 = ssub.s32 %s24, %s43
      %s127 = ssub.s32 %s25, %s39
      %s128 = sor.u32 %s126, %s127
      %p129 = scmp.eq.s32.totalorder %s128, 0
      %s131 = sadd.s32 %s130, 1
      %s132 = scalar_select %p129, %s130, %s131
      %p135 = pneg %p129
      %p136 = scmp.eq.s32.totalorder %s17, 1
      %p137 = por %p135, %p136
      %p138 = scmp.ne.s32.totalorder %s130, %s133
      %p139 = scmp.eq.s32.totalorder %s17, 0
      %p140 = por %p138, %p139
      %p141 = scmp.ne.s32.totalorder %s130, %s133
      %p142 = scmp.eq.s32.totalorder %s22, 1
      %p143 = por %p141, %p142
      %p144 = scmp.ne.s32.totalorder %s133, %s134
      %p145 = scmp.eq.s32.totalorder %s22, 0
      %p146 = por %p144, %p145
      %p147 = scmp.ne.s32.totalorder %s133, %s134
      %p148 = scmp.eq.s32.totalorder %s23, 1
      %p149 = por %p147, %p148
      %p151 = scmp.ne.s32.totalorder %s134, %s150
      %p152 = scmp.eq.s32.totalorder %s23, 0
      %p153 = por %p151, %p152
      %s154 = ssub.s32 %s24, %s43
      %s155 = ssub.s32 %s25, %s39
      %s156 = sor.u32 %s154, %s155
      %p157 = scmp.eq.s32.totalorder %s156, 0
      %s159 = sadd.s32 %s158, 1
      %s160 = scalar_select %p157, %s158, %s159
      %p163 = pneg %p157
      %p164 = scmp.eq.s32.totalorder %s17, 1
      %p165 = por %p163, %p164
      %p166 = scmp.ne.s32.totalorder %s158, %s161
      %p167 = scmp.eq.s32.totalorder %s17, 0
      %p168 = por %p166, %p167
      %p169 = scmp.ne.s32.totalorder %s158, %s161
      %p170 = scmp.eq.s32.totalorder %s22, 1
      %p171 = por %p169, %p170
      %p172 = scmp.ne.s32.totalorder %s161, %s162
      %p173 = scmp.eq.s32.totalorder %s22, 0
      %p174 = por %p172, %p173
      %p175 = scmp.ne.s32.totalorder %s161, %s162
      %p176 = scmp.eq.s32.totalorder %s23, 1
      %p177 = por %p175, %p176
      %p179 = scmp.ne.s32.totalorder %s162, %s178
      %p180 = scmp.eq.s32.totalorder %s23, 0
      %p181 = por %p179, %p180
      %p182 = scmp.le.s32.totalorder 1, %s17
      %p183 = scmp.lt.s32.totalorder %s17, 3
      %p184 = pnand %p182, %p183
      %p185 = pneg %p184
      // Predicated region
      $region9: #{tpu_custom_call.1} parent=5 // pred_check
        _
      $region10: #{tpu_custom_call.1} parent=5 // pred_check_branch
        %187 = sbr.rel (%p184) target = $region12
      $region11: #{tpu_custom_call.1} parent=5 // pred_region
        %s188 = ssub.s32 %s17, 1
        // Predicated region
        $region13: #{tpu_custom_call.1} parent=11 // pred_check
          %p189 = pneg %p92
        $region14: #{tpu_custom_call.1} parent=11 // pred_check_branch
          %191 = sbr.rel (%p189) target = $region16
        $region15: #{tpu_custom_call.1} parent=11 // pred_region
          %s192 = smul.u32 32, %s29
          %s193 = smul.u32 2, %s28
          %s195 = ssub.s32 4096, 4096
          %196 = vsyncadd [#allocation7], %s195
          %s197 = smul.addr %s192, 2
          %s198 = sadd.s32 %s193, %s197
          %s199 = smul.addr %s198, 64
          %s200 = scalar_lea.hbm %s1, %s199
          %s201 = sshll.u32 [#allocation6], 4
          %s202 = int_to_ptr.vmem [resolvable:$true] %s201
          %207 = dma.hbm_to_vmem [thread:$0]  %s200, 4096, %s202, [#allocation7], 128, 128, 8
        $region16: #{tpu_custom_call.1} parent=11 // pred_fallthru
          _
        // Predicated region
        $region17: #{tpu_custom_call.1} parent=11 // pred_check
          %p208 = pneg %p118
        $region18: #{tpu_custom_call.1} parent=11 // pred_check_branch
          %210 = sbr.rel (%p208) target = $region20
        $region19: #{tpu_custom_call.1} parent=11 // pred_region
          %s211 = smul.u32 2, %s28
          %p212 = scmp.lt.s32.totalorder %s211, 1
          %s213 = scalar_select %p212, %s211, 1
          %s214 = scalar_lea.vmem %s2, %s213
          %s215 = smul.u32 2, %s28
        $region20: #{tpu_custom_call.1} parent=11 // pred_fallthru
          _
      $region12: #{tpu_custom_call.1} parent=5 // pred_fallthru
        _
      %p216 = scmp.lt.s32.totalorder %s17, 2
      // Predicated region
      $region21: #{tpu_custom_call.1} parent=5 // pred_check
        %p217 = pneg %p216
      $region22: #{tpu_custom_call.1} parent=5 // pred_check_branch
        %219 = sbr.rel (%p217) target = $region24
      $region23: #{tpu_custom_call.1} parent=5 // pred_region
        // Predicated region
        $region25: #{tpu_custom_call.1} parent=23 // pred_check
          %p220 = pneg %p58
        $region26: #{tpu_custom_call.1} parent=23 // pred_check_branch
          %222 = sbr.rel (%p220) target = $region28
        $region27: #{tpu_custom_call.1} parent=23 // pred_region
          %s223 = sand.u32 %s17, 1
          %s224 = scalar_lea.sflag [#allocation4], %s223
          %s225 = sand.u32 %s48, 1
          %s226 = smul.addr %s225, 256
          %s227 = scalar_lea.vmem [#allocation3], %s226
          %s228 = smul.u32 32, %s24
          %s229 = smul.u32 2, %s26
          %s231 = ssub.s32 4096, 4096
          %232 = vsyncadd %s224, %s231
          %s233 = smul.addr %s228, 2
          %s234 = sadd.s32 %s229, %s233
          %s235 = smul.addr %s234, 64
          %s236 = scalar_lea.hbm %s0, %s235
          %s237 = sshll.u32 %s227, 4
          %s238 = int_to_ptr.vmem [resolvable:$true] %s237
          %243 = dma.hbm_to_vmem [thread:$0]  %s236, 4096, %s238, %s224, 128, 128, 8
        $region28: #{tpu_custom_call.1} parent=23 // pred_fallthru
          _
        // Predicated region
        $region29: #{tpu_custom_call.1} parent=23 // pred_check
          %p244 = pneg %p140
        $region30: #{tpu_custom_call.1} parent=23 // pred_check_branch
          %246 = sbr.rel (%p244) target = $region32
        $region31: #{tpu_custom_call.1} parent=23 // pred_region
          %s247 = sand.u32 %s17, 1
          %s248 = scalar_lea.sflag [#allocation4], %s247
          %s249 = sand.u32 %s130, 1
          %s250 = smul.addr %s249, 512
          %s251 = scalar_lea.vmem [#allocation8], %s250
          %s252 = smul.u32 32, %s24
          %s253 = smul.u32 2, %s25
          %s255 = ssub.s32 8192, 8192
          %256 = vsyncadd %s248, %s255
          %s257 = smul.addr %s252, 2
          %s258 = sadd.s32 %s253, %s257
          %s259 = smul.addr %s258, 128
          %s260 = scalar_lea.hbm %s3, %s259
          %s261 = sshll.u32 %s251, 4
          %s262 = int_to_ptr.vmem [resolvable:$true] %s261
          %267 = dma.hbm_to_vmem [thread:$0]  %s260, 8192, %s262, %s248, 256, 256, 16
        $region32: #{tpu_custom_call.1} parent=23 // pred_fallthru
          _
      $region24: #{tpu_custom_call.1} parent=5 // pred_fallthru
        _
      %p268 = scmp.le.s32.totalorder 1, %s17
      %p269 = scmp.lt.s32.totalorder %s17, 3
      %p270 = pnand %p268, %p269
      %p271 = pneg %p270
      // Predicated region
      $region33: #{tpu_custom_call.1} parent=5 // pred_check
        _
      $region34: #{tpu_custom_call.1} parent=5 // pred_check_branch
        %273 = sbr.rel (%p270) target = $region36
      $region35: #{tpu_custom_call.1} parent=5 // pred_region
        %s274 = ssub.s32 %s17, 1
        %s275 = sand.u32 %s22, 1
        %s276 = scalar_lea.sflag [#allocation4], %s275
        %s277 = sand.u32 %s51, 1
        %s278 = smul.addr %s277, 256
        %s279 = scalar_lea.vmem [#allocation3], %s278
        // Predicated region
        $region37: #{tpu_custom_call.1} parent=35 // pred_check
          %p280 = pneg %p64
        $region38: #{tpu_custom_call.1} parent=35 // pred_check_branch
          %282 = sbr.rel (%p280) target = $region40
        $region39: #{tpu_custom_call.1} parent=35 // pred_region
          %283 = dma.done %s276, 4096
        $region40: #{tpu_custom_call.1} parent=35 // pred_fallthru
          _
        // Predicated region
        $region41: #{tpu_custom_call.1} parent=35 // pred_check
          %p284 = pneg %p92
        $region42: #{tpu_custom_call.1} parent=35 // pred_check_branch
          %286 = sbr.rel (%p284) target = $region44
        $region43: #{tpu_custom_call.1} parent=35 // pred_region
          %287 = dma.done [#allocation7], 4096
        $region44: #{tpu_custom_call.1} parent=35 // pred_fallthru
          _
        %s288 = sand.u32 %s22, 1
        %s289 = scalar_lea.sflag [#allocation4], %s288
        %s290 = sand.u32 %s133, 1
        %s291 = smul.addr %s290, 512
        %s292 = scalar_lea.vmem [#allocation8], %s291
        // Predicated region
        $region45: #{tpu_custom_call.1} parent=35 // pred_check
          %p293 = pneg %p146
        $region46: #{tpu_custom_call.1} parent=35 // pred_check_branch
          %295 = sbr.rel (%p293) target = $region48
        $region47: #{tpu_custom_call.1} parent=35 // pred_region
          %296 = dma.done %s289, 8192
        $region48: #{tpu_custom_call.1} parent=35 // pred_fallthru
          _
        %s297 = sand.u32 %s22, 1
        %s298 = scalar_lea.sflag [#allocation4], %s297
        %s299 = sand.u32 %s51, 1
        %s300 = smul.addr %s299, 256
        %s301 = scalar_lea.vmem [#allocation3], %s300
        %p302 = pneg %p64
        %p303 = pneg %p61
        %p304 = pneg %p92
        %p305 = pneg %p89
        %s306 = smul.u32 2, %s28
        %p307 = scmp.lt.s32.totalorder %s306, 1
        %s308 = scalar_select %p307, %s306, 1
        %s309 = scalar_lea.vmem %s2, %s308
        %p310 = pneg %p118
        %p311 = pneg %p115
        %s312 = sand.u32 %s22, 1
        %s313 = scalar_lea.sflag [#allocation4], %s312
        %s314 = sand.u32 %s133, 1
        %s315 = smul.addr %s314, 512
        %s316 = scalar_lea.vmem [#allocation8], %s315
        %p317 = pneg %p146
        %p318 = pneg %p143
        %p319 = pneg %p174
        %p320 = pneg %p171
        %s321 = sand.u32 %s161, 1
        %s322 = scalar_lea.sflag [#allocation5], %s321
        %s323 = sand.u32 %s161, 1
        %s324 = smul.addr %s323, 512
        %s325 = scalar_lea.vmem [#allocation9], %s324
        %s326 = smul.u32 32, %s27
        %s327 = smul.u32 2, %s29
        %s328 = smul.u32 32, %s29
        %s329 = smul.u32 2, %s28
        %s330 = smul.u32 2, %s28
        %p331 = scmp.lt.s32.totalorder %s330, 1
        %s332 = scalar_select %p331, %s330, 1
        %s333 = scalar_lea.vmem %s2, %s332
        %s334 = smul.u32 2, %s28
        %s335 = smul.u32 32, %s27
        %s336 = smul.u32 2, %s28
        %s337 = smul.u32 32, %s27
        %s338 = smul.u32 2, %s28
        %p339 = scmp.eq.s32.totalorder %s29, 0
        // Predicated region
        $region49: #{tpu_custom_call.1} parent=35 // pred_check
          %p340 = pneg %p339
        $region50: #{tpu_custom_call.1} parent=35 // pred_check_branch
          %342 = sbr.rel (%p340) target = $region52
        $region51: #{tpu_custom_call.1} parent=35 // pred_region
          %343 = vst [vmem:[#allocation2] sm:$0xff] 0.0
          %344 = vst [vmem:[#allocation2 + $0x8] sm:$0xff] 0.0
          %345 = vst [vmem:[#allocation2 + $0x10] sm:$0xff] 0.0
          %346 = vst [vmem:[#allocation2 + $0x18] sm:$0xff] 0.0
          %347 = vst [vmem:[#allocation2 + $0x20] sm:$0xff] 0.0
          %348 = vst [vmem:[#allocation2 + $0x28] sm:$0xff] 0.0
          %349 = vst [vmem:[#allocation2 + $0x30] sm:$0xff] 0.0
          %350 = vst [vmem:[#allocation2 + $0x38] sm:$0xff] 0.0
          %351 = vst [vmem:[#allocation2 + $0x40] sm:$0xff] 0.0
          %352 = vst [vmem:[#allocation2 + $0x48] sm:$0xff] 0.0
          %353 = vst [vmem:[#allocation2 + $0x50] sm:$0xff] 0.0
          %354 = vst [vmem:[#allocation2 + $0x58] sm:$0xff] 0.0
          %355 = vst [vmem:[#allocation2 + $0x60] sm:$0xff] 0.0
          %356 = vst [vmem:[#allocation2 + $0x68] sm:$0xff] 0.0
          %357 = vst [vmem:[#allocation2 + $0x70] sm:$0xff] 0.0
          %358 = vst [vmem:[#allocation2 + $0x78] sm:$0xff] 0.0
          %359 = vst [vmem:[#allocation2 + $0x80] sm:$0xff] 0.0
          %360 = vst [vmem:[#allocation2 + $0x88] sm:$0xff] 0.0
          %361 = vst [vmem:[#allocation2 + $0x90] sm:$0xff] 0.0
          %362 = vst [vmem:[#allocation2 + $0x98] sm:$0xff] 0.0
          %363 = vst [vmem:[#allocation2 + $0xa0] sm:$0xff] 0.0
          %364 = vst [vmem:[#allocation2 + $0xa8] sm:$0xff] 0.0
          %365 = vst [vmem:[#allocation2 + $0xb0] sm:$0xff] 0.0
          %366 = vst [vmem:[#allocation2 + $0xb8] sm:$0xff] 0.0
          %367 = vst [vmem:[#allocation2 + $0xc0] sm:$0xff] 0.0
          %368 = vst [vmem:[#allocation2 + $0xc8] sm:$0xff] 0.0
          %369 = vst [vmem:[#allocation2 + $0xd0] sm:$0xff] 0.0
          %370 = vst [vmem:[#allocation2 + $0xd8] sm:$0xff] 0.0
          %371 = vst [vmem:[#allocation2 + $0xe0] sm:$0xff] 0.0
          %372 = vst [vmem:[#allocation2 + $0xe8] sm:$0xff] 0.0
          %373 = vst [vmem:[#allocation2 + $0xf0] sm:$0xff] 0.0
          %374 = vst [vmem:[#allocation2 + $0xf8] sm:$0xff] 0.0
          %375 = vst [vmem:[#allocation2 + $0x100] sm:$0xff] 0.0
          %376 = vst [vmem:[#allocation2 + $0x108] sm:$0xff] 0.0
          %377 = vst [vmem:[#allocation2 + $0x110] sm:$0xff] 0.0
          %378 = vst [vmem:[#allocation2 + $0x118] sm:$0xff] 0.0
          %379 = vst [vmem:[#allocation2 + $0x120] sm:$0xff] 0.0
          %380 = vst [vmem:[#allocation2 + $0x128] sm:$0xff] 0.0
          %381 = vst [vmem:[#allocation2 + $0x130] sm:$0xff] 0.0
          %382 = vst [vmem:[#allocation2 + $0x138] sm:$0xff] 0.0
          %383 = vst [vmem:[#allocation2 + $0x140] sm:$0xff] 0.0
          %384 = vst [vmem:[#allocation2 + $0x148] sm:$0xff] 0.0
          %385 = vst [vmem:[#allocation2 + $0x150] sm:$0xff] 0.0
          %386 = vst [vmem:[#allocation2 + $0x158] sm:$0xff] 0.0
          %387 = vst [vmem:[#allocation2 + $0x160] sm:$0xff] 0.0
          %388 = vst [vmem:[#allocation2 + $0x168] sm:$0xff] 0.0
          %389 = vst [vmem:[#allocation2 + $0x170] sm:$0xff] 0.0
          %390 = vst [vmem:[#allocation2 + $0x178] sm:$0xff] 0.0
          %391 = vst [vmem:[#allocation2 + $0x180] sm:$0xff] 0.0
          %392 = vst [vmem:[#allocation2 + $0x188] sm:$0xff] 0.0
          %393 = vst [vmem:[#allocation2 + $0x190] sm:$0xff] 0.0
          %394 = vst [vmem:[#allocation2 + $0x198] sm:$0xff] 0.0
          %395 = vst [vmem:[#allocation2 + $0x1a0] sm:$0xff] 0.0
          %396 = vst [vmem:[#allocation2 + $0x1a8] sm:$0xff] 0.0
          %397 = vst [vmem:[#allocation2 + $0x1b0] sm:$0xff] 0.0
          %398 = vst [vmem:[#allocation2 + $0x1b8] sm:$0xff] 0.0
          %399 = vst [vmem:[#allocation2 + $0x1c0] sm:$0xff] 0.0
          %400 = vst [vmem:[#allocation2 + $0x1c8] sm:$0xff] 0.0
          %401 = vst [vmem:[#allocation2 + $0x1d0] sm:$0xff] 0.0
          %402 = vst [vmem:[#allocation2 + $0x1d8] sm:$0xff] 0.0
          %403 = vst [vmem:[#allocation2 + $0x1e0] sm:$0xff] 0.0
          %404 = vst [vmem:[#allocation2 + $0x1e8] sm:$0xff] 0.0
          %405 = vst [vmem:[#allocation2 + $0x1f0] sm:$0xff] 0.0
          %406 = vst [vmem:[#allocation2 + $0x1f8] sm:$0xff] 0.0
        $region52: #{tpu_custom_call.1} parent=35 // pred_fallthru
          _
        %v407 = vld [vmem:[#allocation2] sm:$0xff]
        %v408 = vld [vmem:[#allocation2 + $0x8] sm:$0xff]
        %v409 = vld [vmem:[#allocation2 + $0x10] sm:$0xff]
        %v410 = vld [vmem:[#allocation2 + $0x18] sm:$0xff]
        %v411 = vld [vmem:[#allocation2 + $0x20] sm:$0xff]
        %v412 = vld [vmem:[#allocation2 + $0x28] sm:$0xff]
        %v413 = vld [vmem:[#allocation2 + $0x30] sm:$0xff]
        %v414 = vld [vmem:[#allocation2 + $0x38] sm:$0xff]
        %v415 = vld [vmem:[#allocation2 + $0x40] sm:$0xff]
        %v416 = vld [vmem:[#allocation2 + $0x48] sm:$0xff]
        %v417 = vld [vmem:[#allocation2 + $0x50] sm:$0xff]
        %v418 = vld [vmem:[#allocation2 + $0x58] sm:$0xff]
        %v419 = vld [vmem:[#allocation2 + $0x60] sm:$0xff]
        %v420 = vld [vmem:[#allocation2 + $0x68] sm:$0xff]
        %v421 = vld [vmem:[#allocation2 + $0x70] sm:$0xff]
        %v422 = vld [vmem:[#allocation2 + $0x78] sm:$0xff]
        %v423 = vld [vmem:[#allocation2 + $0x80] sm:$0xff]
        %v424 = vld [vmem:[#allocation2 + $0x88] sm:$0xff]
        %v425 = vld [vmem:[#allocation2 + $0x90] sm:$0xff]
        %v426 = vld [vmem:[#allocation2 + $0x98] sm:$0xff]
        %v427 = vld [vmem:[#allocation2 + $0xa0] sm:$0xff]
        %v428 = vld [vmem:[#allocation2 + $0xa8] sm:$0xff]
        %v429 = vld [vmem:[#allocation2 + $0xb0] sm:$0xff]
        %v430 = vld [vmem:[#allocation2 + $0xb8] sm:$0xff]
        %v431 = vld [vmem:[#allocation2 + $0xc0] sm:$0xff]
        %v432 = vld [vmem:[#allocation2 + $0xc8] sm:$0xff]
        %v433 = vld [vmem:[#allocation2 + $0xd0] sm:$0xff]
        %v434 = vld [vmem:[#allocation2 + $0xd8] sm:$0xff]
        %v435 = vld [vmem:[#allocation2 + $0xe0] sm:$0xff]
        %v436 = vld [vmem:[#allocation2 + $0xe8] sm:$0xff]
        %v437 = vld [vmem:[#allocation2 + $0xf0] sm:$0xff]
        %v438 = vld [vmem:[#allocation2 + $0xf8] sm:$0xff]
        %v439 = vld [vmem:[#allocation2 + $0x100] sm:$0xff]
        %v440 = vld [vmem:[#allocation2 + $0x108] sm:$0xff]
        %v441 = vld [vmem:[#allocation2 + $0x110] sm:$0xff]
        %v442 = vld [vmem:[#allocation2 + $0x118] sm:$0xff]
        %v443 = vld [vmem:[#allocation2 + $0x120] sm:$0xff]
        %v444 = vld [vmem:[#allocation2 + $0x128] sm:$0xff]
        %v445 = vld [vmem:[#allocation2 + $0x130] sm:$0xff]
        %v446 = vld [vmem:[#allocation2 + $0x138] sm:$0xff]
        %v447 = vld [vmem:[#allocation2 + $0x140] sm:$0xff]
        %v448 = vld [vmem:[#allocation2 + $0x148] sm:$0xff]
        %v449 = vld [vmem:[#allocation2 + $0x150] sm:$0xff]
        %v450 = vld [vmem:[#allocation2 + $0x158] sm:$0xff]
        %v451 = vld [vmem:[#allocation2 + $0x160] sm:$0xff]
        %v452 = vld [vmem:[#allocation2 + $0x168] sm:$0xff]
        %v453 = vld [vmem:[#allocation2 + $0x170] sm:$0xff]
        %v454 = vld [vmem:[#allocation2 + $0x178] sm:$0xff]
        %v455 = vld [vmem:[#allocation2 + $0x180] sm:$0xff]
        %v456 = vld [vmem:[#allocation2 + $0x188] sm:$0xff]
        %v457 = vld [vmem:[#allocation2 + $0x190] sm:$0xff]
        %v458 = vld [vmem:[#allocation2 + $0x198] sm:$0xff]
        %v459 = vld [vmem:[#allocation2 + $0x1a0] sm:$0xff]
        %v460 = vld [vmem:[#allocation2 + $0x1a8] sm:$0xff]
        %v461 = vld [vmem:[#allocation2 + $0x1b0] sm:$0xff]
        %v462 = vld [vmem:[#allocation2 + $0x1b8] sm:$0xff]
        %v463 = vld [vmem:[#allocation2 + $0x1c0] sm:$0xff]
        %v464 = vld [vmem:[#allocation2 + $0x1c8] sm:$0xff]
        %v465 = vld [vmem:[#allocation2 + $0x1d0] sm:$0xff]
        %v466 = vld [vmem:[#allocation2 + $0x1d8] sm:$0xff]
        %v467 = vld [vmem:[#allocation2 + $0x1e0] sm:$0xff]
        %v468 = vld [vmem:[#allocation2 + $0x1e8] sm:$0xff]
        %v469 = vld [vmem:[#allocation2 + $0x1f0] sm:$0xff]
        %v470 = vld [vmem:[#allocation2 + $0x1f8] sm:$0xff]
        %v471 = vld [vmem:[%s279] sm:$0xff]
        %v472 = vld [vmem:[%s279 + $0x8] sm:$0xff]
        %v473 = vld [vmem:[%s279 + $0x10] sm:$0xff]
        %v474 = vld [vmem:[%s279 + $0x18] sm:$0xff]
        %v475 = vld [vmem:[%s279 + $0x20] sm:$0xff]
        %v476 = vld [vmem:[%s279 + $0x28] sm:$0xff]
        %v477 = vld [vmem:[%s279 + $0x30] sm:$0xff]
        %v478 = vld [vmem:[%s279 + $0x38] sm:$0xff]
        %v479 = vld [vmem:[%s279 + $0x40] sm:$0xff]
        %v480 = vld [vmem:[%s279 + $0x48] sm:$0xff]
        %v481 = vld [vmem:[%s279 + $0x50] sm:$0xff]
        %v482 = vld [vmem:[%s279 + $0x58] sm:$0xff]
        %v483 = vld [vmem:[%s279 + $0x60] sm:$0xff]
        %v484 = vld [vmem:[%s279 + $0x68] sm:$0xff]
        %v485 = vld [vmem:[%s279 + $0x70] sm:$0xff]
        %v486 = vld [vmem:[%s279 + $0x78] sm:$0xff]
        %v487 = vld [vmem:[%s279 + $0x80] sm:$0xff]
        %v488 = vld [vmem:[%s279 + $0x88] sm:$0xff]
        %v489 = vld [vmem:[%s279 + $0x90] sm:$0xff]
        %v490 = vld [vmem:[%s279 + $0x98] sm:$0xff]
        %v491 = vld [vmem:[%s279 + $0xa0] sm:$0xff]
        %v492 = vld [vmem:[%s279 + $0xa8] sm:$0xff]
        %v493 = vld [vmem:[%s279 + $0xb0] sm:$0xff]
        %v494 = vld [vmem:[%s279 + $0xb8] sm:$0xff]
        %v495 = vld [vmem:[%s279 + $0xc0] sm:$0xff]
        %v496 = vld [vmem:[%s279 + $0xc8] sm:$0xff]
        %v497 = vld [vmem:[%s279 + $0xd0] sm:$0xff]
        %v498 = vld [vmem:[%s279 + $0xd8] sm:$0xff]
        %v499 = vld [vmem:[%s279 + $0xe0] sm:$0xff]
        %v500 = vld [vmem:[%s279 + $0xe8] sm:$0xff]
        %v501 = vld [vmem:[%s279 + $0xf0] sm:$0xff]
        %v502 = vld [vmem:[%s279 + $0xf8] sm:$0xff]
        %v503 = vld [vmem:[#allocation6] sm:$0xff]
        %v504 = vld [vmem:[#allocation6 + $0x8] sm:$0xff]
        %v505 = vld [vmem:[#allocation6 + $0x10] sm:$0xff]
        %v506 = vld [vmem:[#allocation6 + $0x18] sm:$0xff]
        %v507 = vld [vmem:[#allocation6 + $0x20] sm:$0xff]
        %v508 = vld [vmem:[#allocation6 + $0x28] sm:$0xff]
        %v509 = vld [vmem:[#allocation6 + $0x30] sm:$0xff]
        %v510 = vld [vmem:[#allocation6 + $0x38] sm:$0xff]
        %v511 = vld [vmem:[#allocation6 + $0x40] sm:$0xff]
        %v512 = vld [vmem:[#allocation6 + $0x48] sm:$0xff]
        %v513 = vld [vmem:[#allocation6 + $0x50] sm:$0xff]
        %v514 = vld [vmem:[#allocation6 + $0x58] sm:$0xff]
        %v515 = vld [vmem:[#allocation6 + $0x60] sm:$0xff]
        %v516 = vld [vmem:[#allocation6 + $0x68] sm:$0xff]
        %v517 = vld [vmem:[#allocation6 + $0x70] sm:$0xff]
        %v518 = vld [vmem:[#allocation6 + $0x78] sm:$0xff]
        %v519 = vld [vmem:[#allocation6 + $0x80] sm:$0xff]
        %v520 = vld [vmem:[#allocation6 + $0x88] sm:$0xff]
        %v521 = vld [vmem:[#allocation6 + $0x90] sm:$0xff]
        %v522 = vld [vmem:[#allocation6 + $0x98] sm:$0xff]
        %v523 = vld [vmem:[#allocation6 + $0xa0] sm:$0xff]
        %v524 = vld [vmem:[#allocation6 + $0xa8] sm:$0xff]
        %v525 = vld [vmem:[#allocation6 + $0xb0] sm:$0xff]
        %v526 = vld [vmem:[#allocation6 + $0xb8] sm:$0xff]
        %v527 = vld [vmem:[#allocation6 + $0xc0] sm:$0xff]
        %v528 = vld [vmem:[#allocation6 + $0xc8] sm:$0xff]
        %v529 = vld [vmem:[#allocation6 + $0xd0] sm:$0xff]
        %v530 = vld [vmem:[#allocation6 + $0xd8] sm:$0xff]
        %v531 = vld [vmem:[#allocation6 + $0xe0] sm:$0xff]
        %v532 = vld [vmem:[#allocation6 + $0xe8] sm:$0xff]
        %v533 = vld [vmem:[#allocation6 + $0xf0] sm:$0xff]
        %v534 = vld [vmem:[#allocation6 + $0xf8] sm:$0xff]
        %v567 = vunpack.c.l.b16 %v471
        %v568 = vunpack.c.h.b16 %v471
        %v569 = vunpack.c.l.b16 %v472
        %v570 = vunpack.c.h.b16 %v472
        %v571 = vunpack.c.l.b16 %v473
        %v572 = vunpack.c.h.b16 %v473
        %v573 = vunpack.c.l.b16 %v474
        %v574 = vunpack.c.h.b16 %v474
        %v575 = vunpack.c.l.b16 %v475
        %v576 = vunpack.c.h.b16 %v475
        %v577 = vunpack.c.l.b16 %v476
        %v578 = vunpack.c.h.b16 %v476
        %v579 = vunpack.c.l.b16 %v477
        %v580 = vunpack.c.h.b16 %v477
        %v581 = vunpack.c.l.b16 %v478
        %v582 = vunpack.c.h.b16 %v478
        %v583 = vunpack.c.l.b16 %v479
        %v584 = vunpack.c.h.b16 %v479
        %v585 = vunpack.c.l.b16 %v480
        %v586 = vunpack.c.h.b16 %v480
        %v587 = vunpack.c.l.b16 %v481
        %v588 = vunpack.c.h.b16 %v481
        %v589 = vunpack.c.l.b16 %v482
        %v590 = vunpack.c.h.b16 %v482
        %v591 = vunpack.c.l.b16 %v483
        %v592 = vunpack.c.h.b16 %v483
        %v593 = vunpack.c.l.b16 %v484
        %v594 = vunpack.c.h.b16 %v484
        %v595 = vunpack.c.l.b16 %v485
        %v596 = vunpack.c.h.b16 %v485
        %v597 = vunpack.c.l.b16 %v486
        %v598 = vunpack.c.h.b16 %v486
        %v599 = vunpack.c.l.b16 %v487
        %v600 = vunpack.c.h.b16 %v487
        %v601 = vunpack.c.l.b16 %v488
        %v602 = vunpack.c.h.b16 %v488
        %v603 = vunpack.c.l.b16 %v489
        %v604 = vunpack.c.h.b16 %v489
        %v605 = vunpack.c.l.b16 %v490
        %v606 = vunpack.c.h.b16 %v490
        %v607 = vunpack.c.l.b16 %v491
        %v608 = vunpack.c.h.b16 %v491
        %v609 = vunpack.c.l.b16 %v492
        %v610 = vunpack.c.h.b16 %v492
        %v611 = vunpack.c.l.b16 %v493
        %v612 = vunpack.c.h.b16 %v493
        %v613 = vunpack.c.l.b16 %v494
        %v614 = vunpack.c.h.b16 %v494
        %v615 = vunpack.c.l.b16 %v495
        %v616 = vunpack.c.h.b16 %v495
        %v617 = vunpack.c.l.b16 %v496
        %v618 = vunpack.c.h.b16 %v496
        %v619 = vunpack.c.l.b16 %v497
        %v620 = vunpack.c.h.b16 %v497
        %v621 = vunpack.c.l.b16 %v498
        %v622 = vunpack.c.h.b16 %v498
        %v623 = vunpack.c.l.b16 %v499
        %v624 = vunpack.c.h.b16 %v499
        %v625 = vunpack.c.l.b16 %v500
        %v626 = vunpack.c.h.b16 %v500
        %v627 = vunpack.c.l.b16 %v501
        %v628 = vunpack.c.h.b16 %v501
        %v629 = vunpack.c.l.b16 %v502
        %v630 = vunpack.c.h.b16 %v502
        %v631 = vpack.c.b16 %v569, %v567
        %v632 = vpack.c.b16 %v570, %v568
        %v633 = vpack.c.b16 %v573, %v571
        %v634 = vpack.c.b16 %v574, %v572
        %v635 = vpack.c.b16 %v577, %v575
        %v636 = vpack.c.b16 %v578, %v576
        %v637 = vpack.c.b16 %v581, %v579
        %v638 = vpack.c.b16 %v582, %v580
        %v639 = vpack.c.b16 %v585, %v583
        %v640 = vpack.c.b16 %v586, %v584
        %v641 = vpack.c.b16 %v589, %v587
        %v642 = vpack.c.b16 %v590, %v588
        %v643 = vpack.c.b16 %v593, %v591
        %v644 = vpack.c.b16 %v594, %v592
        %v645 = vpack.c.b16 %v597, %v595
        %v646 = vpack.c.b16 %v598, %v596
        %v647 = vpack.c.b16 %v601, %v599
        %v648 = vpack.c.b16 %v602, %v600
        %v649 = vpack.c.b16 %v605, %v603
        %v650 = vpack.c.b16 %v606, %v604
        %v651 = vpack.c.b16 %v609, %v607
        %v652 = vpack.c.b16 %v610, %v608
        %v653 = vpack.c.b16 %v613, %v611
        %v654 = vpack.c.b16 %v614, %v612
        %v655 = vpack.c.b16 %v617, %v615
        %v656 = vpack.c.b16 %v618, %v616
        %v657 = vpack.c.b16 %v621, %v619
        %v658 = vpack.c.b16 %v622, %v620
        %v659 = vpack.c.b16 %v625, %v623
        %v660 = vpack.c.b16 %v626, %v624
        %v661 = vpack.c.b16 %v629, %v627
        %v662 = vpack.c.b16 %v630, %v628
        %v727 = vunpack.c.l.b16 %v503
        %v728 = vunpack.c.h.b16 %v503
        %v729 = vunpack.c.l.b16 %v504
        %v730 = vunpack.c.h.b16 %v504
        %v731 = vunpack.c.l.b16 %v505
        %v732 = vunpack.c.h.b16 %v505
        %v733 = vunpack.c.l.b16 %v506
        %v734 = vunpack.c.h.b16 %v506
        %v735 = vunpack.c.l.b16 %v507
        %v736 = vunpack.c.h.b16 %v507
        %v737 = vunpack.c.l.b16 %v508
        %v738 = vunpack.c.h.b16 %v508
        %v739 = vunpack.c.l.b16 %v509
        %v740 = vunpack.c.h.b16 %v509
        %v741 = vunpack.c.l.b16 %v510
        %v742 = vunpack.c.h.b16 %v510
        %v743 = vunpack.c.l.b16 %v511
        %v744 = vunpack.c.h.b16 %v511
        %v745 = vunpack.c.l.b16 %v512
        %v746 = vunpack.c.h.b16 %v512
        %v747 = vunpack.c.l.b16 %v513
        %v748 = vunpack.c.h.b16 %v513
        %v749 = vunpack.c.l.b16 %v514
        %v750 = vunpack.c.h.b16 %v514
        %v751 = vunpack.c.l.b16 %v515
        %v752 = vunpack.c.h.b16 %v515
        %v753 = vunpack.c.l.b16 %v516
        %v754 = vunpack.c.h.b16 %v516
        %v755 = vunpack.c.l.b16 %v517
        %v756 = vunpack.c.h.b16 %v517
        %v757 = vunpack.c.l.b16 %v518
        %v758 = vunpack.c.h.b16 %v518
        %v759 = vunpack.c.l.b16 %v519
        %v760 = vunpack.c.h.b16 %v519
        %v761 = vunpack.c.l.b16 %v520
        %v762 = vunpack.c.h.b16 %v520
        %v763 = vunpack.c.l.b16 %v521
        %v764 = vunpack.c.h.b16 %v521
        %v765 = vunpack.c.l.b16 %v522
        %v766 = vunpack.c.h.b16 %v522
        %v767 = vunpack.c.l.b16 %v523
        %v768 = vunpack.c.h.b16 %v523
        %v769 = vunpack.c.l.b16 %v524
        %v770 = vunpack.c.h.b16 %v524
        %v771 = vunpack.c.l.b16 %v525
        %v772 = vunpack.c.h.b16 %v525
        %v773 = vunpack.c.l.b16 %v526
        %v774 = vunpack.c.h.b16 %v526
        %v775 = vunpack.c.l.b16 %v527
        %v776 = vunpack.c.h.b16 %v527
        %v777 = vunpack.c.l.b16 %v528
        %v778 = vunpack.c.h.b16 %v528
        %v779 = vunpack.c.l.b16 %v529
        %v780 = vunpack.c.h.b16 %v529
        %v781 = vunpack.c.l.b16 %v530
        %v782 = vunpack.c.h.b16 %v530
        %v783 = vunpack.c.l.b16 %v531
        %v784 = vunpack.c.h.b16 %v531
        %v785 = vunpack.c.l.b16 %v532
        %v786 = vunpack.c.h.b16 %v532
        %v787 = vunpack.c.l.b16 %v533
        %v788 = vunpack.c.h.b16 %v533
        %v789 = vunpack.c.l.b16 %v534
        %v790 = vunpack.c.h.b16 %v534
        %v791 = vpack.c.b16 %v729, %v727
        %v792 = vpack.c.b16 %v730, %v728
        %v793 = vpack.c.b16 %v733, %v731
        %v794 = vpack.c.b16 %v734, %v732
        %v795 = vpack.c.b16 %v737, %v735
        %v796 = vpack.c.b16 %v738, %v736
        %v797 = vpack.c.b16 %v741, %v739
        %v798 = vpack.c.b16 %v742, %v740
        %v799 = vpack.c.b16 %v745, %v743
        %v800 = vpack.c.b16 %v746, %v744
        %v801 = vpack.c.b16 %v749, %v747
        %v802 = vpack.c.b16 %v750, %v748
        %v803 = vpack.c.b16 %v753, %v751
        %v804 = vpack.c.b16 %v754, %v752
        %v805 = vpack.c.b16 %v757, %v755
        %v806 = vpack.c.b16 %v758, %v756
        %v807 = vpack.c.b16 %v761, %v759
        %v808 = vpack.c.b16 %v762, %v760
        %v809 = vpack.c.b16 %v765, %v763
        %v810 = vpack.c.b16 %v766, %v764
        %v811 = vpack.c.b16 %v769, %v767
        %v812 = vpack.c.b16 %v770, %v768
        %v813 = vpack.c.b16 %v773, %v771
        %v814 = vpack.c.b16 %v774, %v772
        %v815 = vpack.c.b16 %v777, %v775
        %v816 = vpack.c.b16 %v778, %v776
        %v817 = vpack.c.b16 %v781, %v779
        %v818 = vpack.c.b16 %v782, %v780
        %v819 = vpack.c.b16 %v785, %v783
        %v820 = vpack.c.b16 %v786, %v784
        %v821 = vpack.c.b16 %v789, %v787
        %v822 = vpack.c.b16 %v790, %v788
        %855 = vmatprep.subr.bf16.mxu0 %v792
        %856 = vmatpush1.bf16.msra.mxu0 %v791
        %857 = vmatprep.subr.bf16.mxu0 %v794
        %858 = vmatpush1.bf16.msra.mxu0 %v793
        %859 = vmatprep.subr.bf16.mxu0 %v796
        %860 = vmatpush1.bf16.msra.mxu0 %v795
        %861 = vmatprep.subr.bf16.mxu0 %v798
        %862 = vmatpush1.bf16.msra.mxu0 %v797
        %863 = vmatprep.subr.bf16.mxu0 %v800
        %864 = vmatpush1.bf16.msra.mxu0 %v799
        %865 = vmatprep.subr.bf16.mxu0 %v802
        %866 = vmatpush1.bf16.msra.mxu0 %v801
        %867 = vmatprep.subr.bf16.mxu0 %v804
        %868 = vmatpush1.bf16.msra.mxu0 %v803
        %869 = vmatprep.subr.bf16.mxu0 %v806
        %870 = vmatpush1.bf16.msra.mxu0 %v805
        %871 = vmatprep.subr.bf16.mxu0 %v808
        %872 = vmatpush1.bf16.msra.mxu0 %v807
        %873 = vmatprep.subr.bf16.mxu0 %v810
        %874 = vmatpush1.bf16.msra.mxu0 %v809
        %875 = vmatprep.subr.bf16.mxu0 %v812
        %876 = vmatpush1.bf16.msra.mxu0 %v811
        %877 = vmatprep.subr.bf16.mxu0 %v814
        %878 = vmatpush1.bf16.msra.mxu0 %v813
        %879 = vmatprep.subr.bf16.mxu0 %v816
        %880 = vmatpush1.bf16.msra.mxu0 %v815
        %881 = vmatprep.subr.bf16.mxu0 %v818
        %882 = vmatpush1.bf16.msra.mxu0 %v817
        %883 = vmatprep.subr.bf16.mxu0 %v820
        %884 = vmatpush1.bf16.msra.mxu0 %v819
        %885 = vmatprep.subr.bf16.mxu0 %v822
        %886 = vmatpush1.bf16.msra.mxu0 %v821
        %887 = vmatprep.mubr.bf16.mxu0 %v632
        %888 = vmatmul.mubr.bf16.gmra.mrb[0].mxu0 %v631
        %v889 = vpop.f32.mrb[0].mxu0
        %v890 = vadd.f32 0.0, %v889
        %v891 = vpop.f32.mrb[0].mxu0
        %v892 = vadd.f32 0.0, %v891
        %v893 = vpop.f32.mrb[0].mxu0
        %v894 = vadd.f32 0.0, %v893
        %v895 = vpop.f32.mrb[0].mxu0
        %v896 = vadd.f32 0.0, %v895
        %897 = vmatprep.mubr.bf16.mxu0 %v634
        %898 = vmatmul.mubr.bf16.gmra.mrb[0].mxu0 %v633
        %v899 = vpop.f32.mrb[0].mxu0
        %v900 = vadd.f32 0.0, %v899
        %v901 = vpop.f32.mrb[0].mxu0
        %v902 = vadd.f32 0.0, %v901
        %v903 = vpop.f32.mrb[0].mxu0
        %v904 = vadd.f32 0.0, %v903
        %v905 = vpop.f32.mrb[0].mxu0
        %v906 = vadd.f32 0.0, %v905
        %907 = vmatprep.mubr.bf16.mxu0 %v636
        %908 = vmatmul.mubr.bf16.gmra.mrb[0].mxu0 %v635
        %v909 = vpop.f32.mrb[0].mxu0
        %v910 = vadd.f32 0.0, %v909
        %v911 = vpop.f32.mrb[0].mxu0
        %v912 = vadd.f32 0.0, %v911
        %v913 = vpop.f32.mrb[0].mxu0
        %v914 = vadd.f32 0.0, %v913
        %v915 = vpop.f32.mrb[0].mxu0
        %v916 = vadd.f32 0.0, %v915
        %917 = vmatprep.mubr.bf16.mxu0 %v638
        %918 = vmatmul.mubr.bf16.gmra.mrb[0].mxu0 %v637
        %v919 = vpop.f32.mrb[0].mxu0
        %v920 = vadd.f32 0.0, %v919
        %v921 = vpop.f32.mrb[0].mxu0
        %v922 = vadd.f32 0.0, %v921
        %v923 = vpop.f32.mrb[0].mxu0
        %v924 = vadd.f32 0.0, %v923
        %v925 = vpop.f32.mrb[0].mxu0
        %v926 = vadd.f32 0.0, %v925
        %927 = vmatprep.mubr.bf16.mxu0 %v640
        %928 = vmatmul.mubr.bf16.gmra.mrb[0].mxu0 %v639
        %v929 = vpop.f32.mrb[0].mxu0
        %v930 = vadd.f32 0.0, %v929
        %v931 = vpop.f32.mrb[0].mxu0
        %v932 = vadd.f32 0.0, %v931
        %v933 = vpop.f32.mrb[0].mxu0
        %v934 = vadd.f32 0.0, %v933
        %v935 = vpop.f32.mrb[0].mxu0
        %v936 = vadd.f32 0.0, %v935
        %937 = vmatprep.mubr.bf16.mxu0 %v642
        %938 = vmatmul.mubr.bf16.gmra.mrb[0].mxu0 %v641
        %v939 = vpop.f32.mrb[0].mxu0
        %v940 = vadd.f32 0.0, %v939
        %v941 = vpop.f32.mrb[0].mxu0
        %v942 = vadd.f32 0.0, %v941
        %v943 = vpop.f32.mrb[0].mxu0
        %v944 = vadd.f32 0.0, %v943
        %v945 = vpop.f32.mrb[0].mxu0
        %v946 = vadd.f32 0.0, %v945
        %947 = vmatprep.mubr.bf16.mxu0 %v644
        %948 = vmatmul.mubr.bf16.gmra.mrb[0].mxu0 %v643
        %v949 = vpop.f32.mrb[0].mxu0
        %v950 = vadd.f32 0.0, %v949
        %v951 = vpop.f32.mrb[0].mxu0
        %v952 = vadd.f32 0.0, %v951
        %v953 = vpop.f32.mrb[0].mxu0
        %v954 = vadd.f32 0.0, %v953
        %v955 = vpop.f32.mrb[0].mxu0
        %v956 = vadd.f32 0.0, %v955
        %957 = vmatprep.mubr.bf16.mxu0 %v646
        %958 = vmatmul.mubr.bf16.gmra.mrb[0].mxu0 %v645
        %v959 = vpop.f32.mrb[0].mxu0
        %v960 = vadd.f32 0.0, %v959
        %v961 = vpop.f32.mrb[0].mxu0
        %v962 = vadd.f32 0.0, %v961
        %v963 = vpop.f32.mrb[0].mxu0
        %v964 = vadd.f32 0.0, %v963
        %v965 = vpop.f32.mrb[0].mxu0
        %v966 = vadd.f32 0.0, %v965
        %967 = vmatprep.mubr.bf16.mxu0 %v648
        %968 = vmatmul.mubr.bf16.gmra.mrb[0].mxu0 %v647
        %v969 = vpop.f32.mrb[0].mxu0
        %v970 = vadd.f32 0.0, %v969
        %v971 = vpop.f32.mrb[0].mxu0
        %v972 = vadd.f32 0.0, %v971
        %v973 = vpop.f32.mrb[0].mxu0
        %v974 = vadd.f32 0.0, %v973
        %v975 = vpop.f32.mrb[0].mxu0
        %v976 = vadd.f32 0.0, %v975
        %977 = vmatprep.mubr.bf16.mxu0 %v650
        %978 = vmatmul.mubr.bf16.gmra.mrb[0].mxu0 %v649
        %v979 = vpop.f32.mrb[0].mxu0
        %v980 = vadd.f32 0.0, %v979
        %v981 = vpop.f32.mrb[0].mxu0
        %v982 = vadd.f32 0.0, %v981
        %v983 = vpop.f32.mrb[0].mxu0
        %v984 = vadd.f32 0.0, %v983
        %v985 = vpop.f32.mrb[0].mxu0
        %v986 = vadd.f32 0.0, %v985
        %987 = vmatprep.mubr.bf16.mxu0 %v652
        %988 = vmatmul.mubr.bf16.gmra.mrb[0].mxu0 %v651
        %v989 = vpop.f32.mrb[0].mxu0
        %v990 = vadd.f32 0.0, %v989
        %v991 = vpop.f32.mrb[0].mxu0
        %v992 = vadd.f32 0.0, %v991
        %v993 = vpop.f32.mrb[0].mxu0
        %v994 = vadd.f32 0.0, %v993
        %v995 = vpop.f32.mrb[0].mxu0
        %v996 = vadd.f32 0.0, %v995
        %997 = vmatprep.mubr.bf16.mxu0 %v654
        %998 = vmatmul.mubr.bf16.gmra.mrb[0].mxu0 %v653
        %v999 = vpop.f32.mrb[0].mxu0
        %v1000 = vadd.f32 0.0, %v999
        %v1001 = vpop.f32.mrb[0].mxu0
        %v1002 = vadd.f32 0.0, %v1001
        %v1003 = vpop.f32.mrb[0].mxu0
        %v1004 = vadd.f32 0.0, %v1003
        %v1005 = vpop.f32.mrb[0].mxu0
        %v1006 = vadd.f32 0.0, %v1005
        %1007 = vmatprep.mubr.bf16.mxu0 %v656
        %1008 = vmatmul.mubr.bf16.gmra.mrb[0].mxu0 %v655
        %v1009 = vpop.f32.mrb[0].mxu0
        %v1010 = vadd.f32 0.0, %v1009
        %v1011 = vpop.f32.mrb[0].mxu0
        %v1012 = vadd.f32 0.0, %v1011
        %v1013 = vpop.f32.mrb[0].mxu0
        %v1014 = vadd.f32 0.0, %v1013
        %v1015 = vpop.f32.mrb[0].mxu0
        %v1016 = vadd.f32 0.0, %v1015
        %1017 = vmatprep.mubr.bf16.mxu0 %v658
        %1018 = vmatmul.mubr.bf16.gmra.mrb[0].mxu0 %v657
        %v1019 = vpop.f32.mrb[0].mxu0
        %v1020 = vadd.f32 0.0, %v1019
        %v1021 = vpop.f32.mrb[0].mxu0
        %v1022 = vadd.f32 0.0, %v1021
        %v1023 = vpop.f32.mrb[0].mxu0
        %v1024 = vadd.f32 0.0, %v1023
        %v1025 = vpop.f32.mrb[0].mxu0
        %v1026 = vadd.f32 0.0, %v1025
        %1027 = vmatprep.mubr.bf16.mxu0 %v660
        %1028 = vmatmul.mubr.bf16.gmra.mrb[0].mxu0 %v659
        %v1029 = vpop.f32.mrb[0].mxu0
        %v1030 = vadd.f32 0.0, %v1029
        %v1031 = vpop.f32.mrb[0].mxu0
        %v1032 = vadd.f32 0.0, %v1031
        %v1033 = vpop.f32.mrb[0].mxu0
        %v1034 = vadd.f32 0.0, %v1033
        %v1035 = vpop.f32.mrb[0].mxu0
        %v1036 = vadd.f32 0.0, %v1035
        %1037 = vmatprep.mubr.bf16.mxu0 %v662
        %1038 = vmatmul.mubr.bf16.gmra.mrb[0].mxu0 %v661
        %v1039 = vpop.f32.mrb[0].mxu0
        %v1040 = vadd.f32 0.0, %v1039
        %v1041 = vpop.f32.mrb[0].mxu0
        %v1042 = vadd.f32 0.0, %v1041
        %v1043 = vpop.f32.mrb[0].mxu0
        %v1044 = vadd.f32 0.0, %v1043
        %v1045 = vpop.f32.mrb[0].mxu0
        %v1046 = vadd.f32 0.0, %v1045
        %1047 = vdwg.mxu0
        %v1048 = vadd.f32 %v407, %v890
        %v1049 = vadd.f32 %v408, %v892
        %v1050 = vadd.f32 %v409, %v894
        %v1051 = vadd.f32 %v410, %v896
        %v1052 = vadd.f32 %v411, %v900
        %v1053 = vadd.f32 %v412, %v902
        %v1054 = vadd.f32 %v413, %v904
        %v1055 = vadd.f32 %v414, %v906
        %v1056 = vadd.f32 %v415, %v910
        %v1057 = vadd.f32 %v416, %v912
        %v1058 = vadd.f32 %v417, %v914
        %v1059 = vadd.f32 %v418, %v916
        %v1060 = vadd.f32 %v419, %v920
        %v1061 = vadd.f32 %v420, %v922
        %v1062 = vadd.f32 %v421, %v924
        %v1063 = vadd.f32 %v422, %v926
        %v1064 = vadd.f32 %v423, %v930
        %v1065 = vadd.f32 %v424, %v932
        %v1066 = vadd.f32 %v425, %v934
        %v1067 = vadd.f32 %v426, %v936
        %v1068 = vadd.f32 %v427, %v940
        %v1069 = vadd.f32 %v428, %v942
        %v1070 = vadd.f32 %v429, %v944
        %v1071 = vadd.f32 %v430, %v946
        %v1072 = vadd.f32 %v431, %v950
        %v1073 = vadd.f32 %v432, %v952
        %v1074 = vadd.f32 %v433, %v954
        %v1075 = vadd.f32 %v434, %v956
        %v1076 = vadd.f32 %v435, %v960
        %v1077 = vadd.f32 %v436, %v962
        %v1078 = vadd.f32 %v437, %v964
        %v1079 = vadd.f32 %v438, %v966
        %v1080 = vadd.f32 %v439, %v970
        %v1081 = vadd.f32 %v440, %v972
        %v1082 = vadd.f32 %v441, %v974
        %v1083 = vadd.f32 %v442, %v976
        %v1084 = vadd.f32 %v443, %v980
        %v1085 = vadd.f32 %v444, %v982
        %v1086 = vadd.f32 %v445, %v984
        %v1087 = vadd.f32 %v446, %v986
        %v1088 = vadd.f32 %v447, %v990
        %v1089 = vadd.f32 %v448, %v992
        %v1090 = vadd.f32 %v449, %v994
        %v1091 = vadd.f32 %v450, %v996
        %v1092 = vadd.f32 %v451, %v1000
        %v1093 = vadd.f32 %v452, %v1002
        %v1094 = vadd.f32 %v453, %v1004
        %v1095 = vadd.f32 %v454, %v1006
        %v1096 = vadd.f32 %v455, %v1010
        %v1097 = vadd.f32 %v456, %v1012
        %v1098 = vadd.f32 %v457, %v1014
        %v1099 = vadd.f32 %v458, %v1016
        %v1100 = vadd.f32 %v459, %v1020
        %v1101 = vadd.f32 %v460, %v1022
        %v1102 = vadd.f32 %v461, %v1024
        %v1103 = vadd.f32 %v462, %v1026
        %v1104 = vadd.f32 %v463, %v1030
        %v1105 = vadd.f32 %v464, %v1032
        %v1106 = vadd.f32 %v465, %v1034
        %v1107 = vadd.f32 %v466, %v1036
        %v1108 = vadd.f32 %v467, %v1040
        %v1109 = vadd.f32 %v468, %v1042
        %v1110 = vadd.f32 %v469, %v1044
        %v1111 = vadd.f32 %v470, %v1046
        %1112 = vst [vmem:[#allocation2] sm:$0xff] %v1048
        %1113 = vst [vmem:[#allocation2 + $0x8] sm:$0xff] %v1049
        %1114 = vst [vmem:[#allocation2 + $0x10] sm:$0xff] %v1050
        %1115 = vst [vmem:[#allocation2 + $0x18] sm:$0xff] %v1051
        %1116 = vst [vmem:[#allocation2 + $0x20] sm:$0xff] %v1052
        %1117 = vst [vmem:[#allocation2 + $0x28] sm:$0xff] %v1053
        %1118 = vst [vmem:[#allocation2 + $0x30] sm:$0xff] %v1054
        %1119 = vst [vmem:[#allocation2 + $0x38] sm:$0xff] %v1055
        %1120 = vst [vmem:[#allocation2 + $0x40] sm:$0xff] %v1056
        %1121 = vst [vmem:[#allocation2 + $0x48] sm:$0xff] %v1057
        %1122 = vst [vmem:[#allocation2 + $0x50] sm:$0xff] %v1058
        %1123 = vst [vmem:[#allocation2 + $0x58] sm:$0xff] %v1059
        %1124 = vst [vmem:[#allocation2 + $0x60] sm:$0xff] %v1060
        %1125 = vst [vmem:[#allocation2 + $0x68] sm:$0xff] %v1061
        %1126 = vst [vmem:[#allocation2 + $0x70] sm:$0xff] %v1062
        %1127 = vst [vmem:[#allocation2 + $0x78] sm:$0xff] %v1063
        %1128 = vst [vmem:[#allocation2 + $0x80] sm:$0xff] %v1064
        %1129 = vst [vmem:[#allocation2 + $0x88] sm:$0xff] %v1065
        %1130 = vst [vmem:[#allocation2 + $0x90] sm:$0xff] %v1066
        %1131 = vst [vmem:[#allocation2 + $0x98] sm:$0xff] %v1067
        %1132 = vst [vmem:[#allocation2 + $0xa0] sm:$0xff] %v1068
        %1133 = vst [vmem:[#allocation2 + $0xa8] sm:$0xff] %v1069
        %1134 = vst [vmem:[#allocation2 + $0xb0] sm:$0xff] %v1070
        %1135 = vst [vmem:[#allocation2 + $0xb8] sm:$0xff] %v1071
        %1136 = vst [vmem:[#allocation2 + $0xc0] sm:$0xff] %v1072
        %1137 = vst [vmem:[#allocation2 + $0xc8] sm:$0xff] %v1073
        %1138 = vst [vmem:[#allocation2 + $0xd0] sm:$0xff] %v1074
        %1139 = vst [vmem:[#allocation2 + $0xd8] sm:$0xff] %v1075
        %1140 = vst [vmem:[#allocation2 + $0xe0] sm:$0xff] %v1076
        %1141 = vst [vmem:[#allocation2 + $0xe8] sm:$0xff] %v1077
        %1142 = vst [vmem:[#allocation2 + $0xf0] sm:$0xff] %v1078
        %1143 = vst [vmem:[#allocation2 + $0xf8] sm:$0xff] %v1079
        %1144 = vst [vmem:[#allocation2 + $0x100] sm:$0xff] %v1080
        %1145 = vst [vmem:[#allocation2 + $0x108] sm:$0xff] %v1081
        %1146 = vst [vmem:[#allocation2 + $0x110] sm:$0xff] %v1082
        %1147 = vst [vmem:[#allocation2 + $0x118] sm:$0xff] %v1083
        %1148 = vst [vmem:[#allocation2 + $0x120] sm:$0xff] %v1084
        %1149 = vst [vmem:[#allocation2 + $0x128] sm:$0xff] %v1085
        %1150 = vst [vmem:[#allocation2 + $0x130] sm:$0xff] %v1086
        %1151 = vst [vmem:[#allocation2 + $0x138] sm:$0xff] %v1087
        %1152 = vst [vmem:[#allocation2 + $0x140] sm:$0xff] %v1088
        %1153 = vst [vmem:[#allocation2 + $0x148] sm:$0xff] %v1089
        %1154 = vst [vmem:[#allocation2 + $0x150] sm:$0xff] %v1090
        %1155 = vst [vmem:[#allocation2 + $0x158] sm:$0xff] %v1091
        %1156 = vst [vmem:[#allocation2 + $0x160] sm:$0xff] %v1092
        %1157 = vst [vmem:[#allocation2 + $0x168] sm:$0xff] %v1093
        %1158 = vst [vmem:[#allocation2 + $0x170] sm:$0xff] %v1094
        %1159 = vst [vmem:[#allocation2 + $0x178] sm:$0xff] %v1095
        %1160 = vst [vmem:[#allocation2 + $0x180] sm:$0xff] %v1096
        %1161 = vst [vmem:[#allocation2 + $0x188] sm:$0xff] %v1097
        %1162 = vst [vmem:[#allocation2 + $0x190] sm:$0xff] %v1098
        %1163 = vst [vmem:[#allocation2 + $0x198] sm:$0xff] %v1099
        %1164 = vst [vmem:[#allocation2 + $0x1a0] sm:$0xff] %v1100
        %1165 = vst [vmem:[#allocation2 + $0x1a8] sm:$0xff] %v1101
        %1166 = vst [vmem:[#allocation2 + $0x1b0] sm:$0xff] %v1102
        %1167 = vst [vmem:[#allocation2 + $0x1b8] sm:$0xff] %v1103
        %1168 = vst [vmem:[#allocation2 + $0x1c0] sm:$0xff] %v1104
        %1169 = vst [vmem:[#allocation2 + $0x1c8] sm:$0xff] %v1105
        %1170 = vst [vmem:[#allocation2 + $0x1d0] sm:$0xff] %v1106
        %1171 = vst [vmem:[#allocation2 + $0x1d8] sm:$0xff] %v1107
        %1172 = vst [vmem:[#allocation2 + $0x1e0] sm:$0xff] %v1108
        %1173 = vst [vmem:[#allocation2 + $0x1e8] sm:$0xff] %v1109
        %1174 = vst [vmem:[#allocation2 + $0x1f0] sm:$0xff] %v1110
        %1175 = vst [vmem:[#allocation2 + $0x1f8] sm:$0xff] %v1111
        // Predicated region
        $region53: #{tpu_custom_call.1} parent=35 // pred_check
          %p1176 = pneg %p339
        $region54: #{tpu_custom_call.1} parent=35 // pred_check_branch
          %1178 = sbr.rel (%p1176) target = $region56
        $region55: #{tpu_custom_call.1} parent=35 // pred_region
          %v1179 = vld [vmem:[#allocation2] sm:$0xff]
          %v1180 = vld [vmem:[#allocation2 + $0x8] sm:$0xff]
          %v1181 = vld [vmem:[#allocation2 + $0x10] sm:$0xff]
          %v1182 = vld [vmem:[#allocation2 + $0x18] sm:$0xff]
          %v1183 = vld [vmem:[#allocation2 + $0x20] sm:$0xff]
          %v1184 = vld [vmem:[#allocation2 + $0x28] sm:$0xff]
          %v1185 = vld [vmem:[#allocation2 + $0x30] sm:$0xff]
          %v1186 = vld [vmem:[#allocation2 + $0x38] sm:$0xff]
          %v1187 = vld [vmem:[#allocation2 + $0x40] sm:$0xff]
          %v1188 = vld [vmem:[#allocation2 + $0x48] sm:$0xff]
          %v1189 = vld [vmem:[#allocation2 + $0x50] sm:$0xff]
          %v1190 = vld [vmem:[#allocation2 + $0x58] sm:$0xff]
          %v1191 = vld [vmem:[#allocation2 + $0x60] sm:$0xff]
          %v1192 = vld [vmem:[#allocation2 + $0x68] sm:$0xff]
          %v1193 = vld [vmem:[#allocation2 + $0x70] sm:$0xff]
          %v1194 = vld [vmem:[#allocation2 + $0x78] sm:$0xff]
          %v1195 = vld [vmem:[#allocation2 + $0x80] sm:$0xff]
          %v1196 = vld [vmem:[#allocation2 + $0x88] sm:$0xff]
          %v1197 = vld [vmem:[#allocation2 + $0x90] sm:$0xff]
          %v1198 = vld [vmem:[#allocation2 + $0x98] sm:$0xff]
          %v1199 = vld [vmem:[#allocation2 + $0xa0] sm:$0xff]
          %v1200 = vld [vmem:[#allocation2 + $0xa8] sm:$0xff]
          %v1201 = vld [vmem:[#allocation2 + $0xb0] sm:$0xff]
          %v1202 = vld [vmem:[#allocation2 + $0xb8] sm:$0xff]
          %v1203 = vld [vmem:[#allocation2 + $0xc0] sm:$0xff]
          %v1204 = vld [vmem:[#allocation2 + $0xc8] sm:$0xff]
          %v1205 = vld [vmem:[#allocation2 + $0xd0] sm:$0xff]
          %v1206 = vld [vmem:[#allocation2 + $0xd8] sm:$0xff]
          %v1207 = vld [vmem:[#allocation2 + $0xe0] sm:$0xff]
          %v1208 = vld [vmem:[#allocation2 + $0xe8] sm:$0xff]
          %v1209 = vld [vmem:[#allocation2 + $0xf0] sm:$0xff]
          %v1210 = vld [vmem:[#allocation2 + $0xf8] sm:$0xff]
          %v1211 = vld [vmem:[#allocation2 + $0x100] sm:$0xff]
          %v1212 = vld [vmem:[#allocation2 + $0x108] sm:$0xff]
          %v1213 = vld [vmem:[#allocation2 + $0x110] sm:$0xff]
          %v1214 = vld [vmem:[#allocation2 + $0x118] sm:$0xff]
          %v1215 = vld [vmem:[#allocation2 + $0x120] sm:$0xff]
          %v1216 = vld [vmem:[#allocation2 + $0x128] sm:$0xff]
          %v1217 = vld [vmem:[#allocation2 + $0x130] sm:$0xff]
          %v1218 = vld [vmem:[#allocation2 + $0x138] sm:$0xff]
          %v1219 = vld [vmem:[#allocation2 + $0x140] sm:$0xff]
          %v1220 = vld [vmem:[#allocation2 + $0x148] sm:$0xff]
          %v1221 = vld [vmem:[#allocation2 + $0x150] sm:$0xff]
          %v1222 = vld [vmem:[#allocation2 + $0x158] sm:$0xff]
          %v1223 = vld [vmem:[#allocation2 + $0x160] sm:$0xff]
          %v1224 = vld [vmem:[#allocation2 + $0x168] sm:$0xff]
          %v1225 = vld [vmem:[#allocation2 + $0x170] sm:$0xff]
          %v1226 = vld [vmem:[#allocation2 + $0x178] sm:$0xff]
          %v1227 = vld [vmem:[#allocation2 + $0x180] sm:$0xff]
          %v1228 = vld [vmem:[#allocation2 + $0x188] sm:$0xff]
          %v1229 = vld [vmem:[#allocation2 + $0x190] sm:$0xff]
          %v1230 = vld [vmem:[#allocation2 + $0x198] sm:$0xff]
          %v1231 = vld [vmem:[#allocation2 + $0x1a0] sm:$0xff]
          %v1232 = vld [vmem:[#allocation2 + $0x1a8] sm:$0xff]
          %v1233 = vld [vmem:[#allocation2 + $0x1b0] sm:$0xff]
          %v1234 = vld [vmem:[#allocation2 + $0x1b8] sm:$0xff]
          %v1235 = vld [vmem:[#allocation2 + $0x1c0] sm:$0xff]
          %v1236 = vld [vmem:[#allocation2 + $0x1c8] sm:$0xff]
          %v1237 = vld [vmem:[#allocation2 + $0x1d0] sm:$0xff]
          %v1238 = vld [vmem:[#allocation2 + $0x1d8] sm:$0xff]
          %v1239 = vld [vmem:[#allocation2 + $0x1e0] sm:$0xff]
          %v1240 = vld [vmem:[#allocation2 + $0x1e8] sm:$0xff]
          %v1241 = vld [vmem:[#allocation2 + $0x1f0] sm:$0xff]
          %v1242 = vld [vmem:[#allocation2 + $0x1f8] sm:$0xff]
          %v1243 = vld [vmem:[%s333] sm:$0x3]
          %v1245 = vlaneseq
          %v1246 = vshrl.u32 %v1245, 7
          %v1247 = vsub.s32 0, %v1246
          %v1248 = vrot.slane %v1243, %v1247
          %v1249 = vlaneseq
          %v1250 = vshrl.u32 %v1249, 7
          %v1251 = vsub.s32 1, %v1250
          %v1252 = vrot.slane %v1243, %v1251
          %v1255 = vadd.f32 %v1179, %v1248
          %v1256 = vadd.f32 %v1180, %v1252
          %v1257 = vadd.f32 %v1181, %v1248
          %v1258 = vadd.f32 %v1182, %v1252
          %v1259 = vadd.f32 %v1183, %v1248
          %v1260 = vadd.f32 %v1184, %v1252
          %v1261 = vadd.f32 %v1185, %v1248
          %v1262 = vadd.f32 %v1186, %v1252
          %v1263 = vadd.f32 %v1187, %v1248
          %v1264 = vadd.f32 %v1188, %v1252
          %v1265 = vadd.f32 %v1189, %v1248
          %v1266 = vadd.f32 %v1190, %v1252
          %v1267 = vadd.f32 %v1191, %v1248
          %v1268 = vadd.f32 %v1192, %v1252
          %v1269 = vadd.f32 %v1193, %v1248
          %v1270 = vadd.f32 %v1194, %v1252
          %v1271 = vadd.f32 %v1195, %v1248
          %v1272 = vadd.f32 %v1196, %v1252
          %v1273 = vadd.f32 %v1197, %v1248
          %v1274 = vadd.f32 %v1198, %v1252
          %v1275 = vadd.f32 %v1199, %v1248
          %v1276 = vadd.f32 %v1200, %v1252
          %v1277 = vadd.f32 %v1201, %v1248
          %v1278 = vadd.f32 %v1202, %v1252
          %v1279 = vadd.f32 %v1203, %v1248
          %v1280 = vadd.f32 %v1204, %v1252
          %v1281 = vadd.f32 %v1205, %v1248
          %v1282 = vadd.f32 %v1206, %v1252
          %v1283 = vadd.f32 %v1207, %v1248
          %v1284 = vadd.f32 %v1208, %v1252
          %v1285 = vadd.f32 %v1209, %v1248
          %v1286 = vadd.f32 %v1210, %v1252
          %v1287 = vadd.f32 %v1211, %v1248
          %v1288 = vadd.f32 %v1212, %v1252
          %v1289 = vadd.f32 %v1213, %v1248
          %v1290 = vadd.f32 %v1214, %v1252
          %v1291 = vadd.f32 %v1215, %v1248
          %v1292 = vadd.f32 %v1216, %v1252
          %v1293 = vadd.f32 %v1217, %v1248
          %v1294 = vadd.f32 %v1218, %v1252
          %v1295 = vadd.f32 %v1219, %v1248
          %v1296 = vadd.f32 %v1220, %v1252
          %v1297 = vadd.f32 %v1221, %v1248
          %v1298 = vadd.f32 %v1222, %v1252
          %v1299 = vadd.f32 %v1223, %v1248
          %v1300 = vadd.f32 %v1224, %v1252
          %v1301 = vadd.f32 %v1225, %v1248
          %v1302 = vadd.f32 %v1226, %v1252
          %v1303 = vadd.f32 %v1227, %v1248
          %v1304 = vadd.f32 %v1228, %v1252
          %v1305 = vadd.f32 %v1229, %v1248
          %v1306 = vadd.f32 %v1230, %v1252
          %v1307 = vadd.f32 %v1231, %v1248
          %v1308 = vadd.f32 %v1232, %v1252
          %v1309 = vadd.f32 %v1233, %v1248
          %v1310 = vadd.f32 %v1234, %v1252
          %v1311 = vadd.f32 %v1235, %v1248
          %v1312 = vadd.f32 %v1236, %v1252
          %v1313 = vadd.f32 %v1237, %v1248
          %v1314 = vadd.f32 %v1238, %v1252
          %v1315 = vadd.f32 %v1239, %v1248
          %v1316 = vadd.f32 %v1240, %v1252
          %v1317 = vadd.f32 %v1241, %v1248
          %v1318 = vadd.f32 %v1242, %v1252
          %v1319 = vmax.f32 %v1255, 0.0
          %v1320 = vmax.f32 %v1256, 0.0
          %v1321 = vmax.f32 %v1257, 0.0
          %v1322 = vmax.f32 %v1258, 0.0
          %v1323 = vmax.f32 %v1259, 0.0
          %v1324 = vmax.f32 %v1260, 0.0
          %v1325 = vmax.f32 %v1261, 0.0
          %v1326 = vmax.f32 %v1262, 0.0
          %v1327 = vmax.f32 %v1263, 0.0
          %v1328 = vmax.f32 %v1264, 0.0
          %v1329 = vmax.f32 %v1265, 0.0
          %v1330 = vmax.f32 %v1266, 0.0
          %v1331 = vmax.f32 %v1267, 0.0
          %v1332 = vmax.f32 %v1268, 0.0
          %v1333 = vmax.f32 %v1269, 0.0
          %v1334 = vmax.f32 %v1270, 0.0
          %v1335 = vmax.f32 %v1271, 0.0
          %v1336 = vmax.f32 %v1272, 0.0
          %v1337 = vmax.f32 %v1273, 0.0
          %v1338 = vmax.f32 %v1274, 0.0
          %v1339 = vmax.f32 %v1275, 0.0
          %v1340 = vmax.f32 %v1276, 0.0
          %v1341 = vmax.f32 %v1277, 0.0
          %v1342 = vmax.f32 %v1278, 0.0
          %v1343 = vmax.f32 %v1279, 0.0
          %v1344 = vmax.f32 %v1280, 0.0
          %v1345 = vmax.f32 %v1281, 0.0
          %v1346 = vmax.f32 %v1282, 0.0
          %v1347 = vmax.f32 %v1283, 0.0
          %v1348 = vmax.f32 %v1284, 0.0
          %v1349 = vmax.f32 %v1285, 0.0
          %v1350 = vmax.f32 %v1286, 0.0
          %v1351 = vmax.f32 %v1287, 0.0
          %v1352 = vmax.f32 %v1288, 0.0
          %v1353 = vmax.f32 %v1289, 0.0
          %v1354 = vmax.f32 %v1290, 0.0
          %v1355 = vmax.f32 %v1291, 0.0
          %v1356 = vmax.f32 %v1292, 0.0
          %v1357 = vmax.f32 %v1293, 0.0
          %v1358 = vmax.f32 %v1294, 0.0
          %v1359 = vmax.f32 %v1295, 0.0
          %v1360 = vmax.f32 %v1296, 0.0
          %v1361 = vmax.f32 %v1297, 0.0
          %v1362 = vmax.f32 %v1298, 0.0
          %v1363 = vmax.f32 %v1299, 0.0
          %v1364 = vmax.f32 %v1300, 0.0
          %v1365 = vmax.f32 %v1301, 0.0
          %v1366 = vmax.f32 %v1302, 0.0
          %v1367 = vmax.f32 %v1303, 0.0
          %v1368 = vmax.f32 %v1304, 0.0
          %v1369 = vmax.f32 %v1305, 0.0
          %v1370 = vmax.f32 %v1306, 0.0
          %v1371 = vmax.f32 %v1307, 0.0
          %v1372 = vmax.f32 %v1308, 0.0
          %v1373 = vmax.f32 %v1309, 0.0
          %v1374 = vmax.f32 %v1310, 0.0
          %v1375 = vmax.f32 %v1311, 0.0
          %v1376 = vmax.f32 %v1312, 0.0
          %v1377 = vmax.f32 %v1313, 0.0
          %v1378 = vmax.f32 %v1314, 0.0
          %v1379 = vmax.f32 %v1315, 0.0
          %v1380 = vmax.f32 %v1316, 0.0
          %v1381 = vmax.f32 %v1317, 0.0
          %v1382 = vmax.f32 %v1318, 0.0
          %v1383 = vld [vmem:[%s292] sm:$0xff]
          %v1384 = vld [vmem:[%s292 + $0x8] sm:$0xff]
          %v1385 = vld [vmem:[%s292 + $0x10] sm:$0xff]
          %v1386 = vld [vmem:[%s292 + $0x18] sm:$0xff]
          %v1387 = vld [vmem:[%s292 + $0x20] sm:$0xff]
          %v1388 = vld [vmem:[%s292 + $0x28] sm:$0xff]
          %v1389 = vld [vmem:[%s292 + $0x30] sm:$0xff]
          %v1390 = vld [vmem:[%s292 + $0x38] sm:$0xff]
          %v1391 = vld [vmem:[%s292 + $0x40] sm:$0xff]
          %v1392 = vld [vmem:[%s292 + $0x48] sm:$0xff]
          %v1393 = vld [vmem:[%s292 + $0x50] sm:$0xff]
          %v1394 = vld [vmem:[%s292 + $0x58] sm:$0xff]
          %v1395 = vld [vmem:[%s292 + $0x60] sm:$0xff]
          %v1396 = vld [vmem:[%s292 + $0x68] sm:$0xff]
          %v1397 = vld [vmem:[%s292 + $0x70] sm:$0xff]
          %v1398 = vld [vmem:[%s292 + $0x78] sm:$0xff]
          %v1399 = vld [vmem:[%s292 + $0x80] sm:$0xff]
          %v1400 = vld [vmem:[%s292 + $0x88] sm:$0xff]
          %v1401 = vld [vmem:[%s292 + $0x90] sm:$0xff]
          %v1402 = vld [vmem:[%s292 + $0x98] sm:$0xff]
          %v1403 = vld [vmem:[%s292 + $0xa0] sm:$0xff]
          %v1404 = vld [vmem:[%s292 + $0xa8] sm:$0xff]
          %v1405 = vld [vmem:[%s292 + $0xb0] sm:$0xff]
          %v1406 = vld [vmem:[%s292 + $0xb8] sm:$0xff]
          %v1407 = vld [vmem:[%s292 + $0xc0] sm:$0xff]
          %v1408 = vld [vmem:[%s292 + $0xc8] sm:$0xff]
          %v1409 = vld [vmem:[%s292 + $0xd0] sm:$0xff]
          %v1410 = vld [vmem:[%s292 + $0xd8] sm:$0xff]
          %v1411 = vld [vmem:[%s292 + $0xe0] sm:$0xff]
          %v1412 = vld [vmem:[%s292 + $0xe8] sm:$0xff]
          %v1413 = vld [vmem:[%s292 + $0xf0] sm:$0xff]
          %v1414 = vld [vmem:[%s292 + $0xf8] sm:$0xff]
          %v1415 = vld [vmem:[%s292 + $0x100] sm:$0xff]
          %v1416 = vld [vmem:[%s292 + $0x108] sm:$0xff]
          %v1417 = vld [vmem:[%s292 + $0x110] sm:$0xff]
          %v1418 = vld [vmem:[%s292 + $0x118] sm:$0xff]
          %v1419 = vld [vmem:[%s292 + $0x120] sm:$0xff]
          %v1420 = vld [vmem:[%s292 + $0x128] sm:$0xff]
          %v1421 = vld [vmem:[%s292 + $0x130] sm:$0xff]
          %v1422 = vld [vmem:[%s292 + $0x138] sm:$0xff]
          %v1423 = vld [vmem:[%s292 + $0x140] sm:$0xff]
          %v1424 = vld [vmem:[%s292 + $0x148] sm:$0xff]
          %v1425 = vld [vmem:[%s292 + $0x150] sm:$0xff]
          %v1426 = vld [vmem:[%s292 + $0x158] sm:$0xff]
          %v1427 = vld [vmem:[%s292 + $0x160] sm:$0xff]
          %v1428 = vld [vmem:[%s292 + $0x168] sm:$0xff]
          %v1429 = vld [vmem:[%s292 + $0x170] sm:$0xff]
          %v1430 = vld [vmem:[%s292 + $0x178] sm:$0xff]
          %v1431 = vld [vmem:[%s292 + $0x180] sm:$0xff]
          %v1432 = vld [vmem:[%s292 + $0x188] sm:$0xff]
          %v1433 = vld [vmem:[%s292 + $0x190] sm:$0xff]
          %v1434 = vld [vmem:[%s292 + $0x198] sm:$0xff]
          %v1435 = vld [vmem:[%s292 + $0x1a0] sm:$0xff]
          %v1436 = vld [vmem:[%s292 + $0x1a8] sm:$0xff]
          %v1437 = vld [vmem:[%s292 + $0x1b0] sm:$0xff]
          %v1438 = vld [vmem:[%s292 + $0x1b8] sm:$0xff]
          %v1439 = vld [vmem:[%s292 + $0x1c0] sm:$0xff]
          %v1440 = vld [vmem:[%s292 + $0x1c8] sm:$0xff]
          %v1441 = vld [vmem:[%s292 + $0x1d0] sm:$0xff]
          %v1442 = vld [vmem:[%s292 + $0x1d8] sm:$0xff]
          %v1443 = vld [vmem:[%s292 + $0x1e0] sm:$0xff]
          %v1444 = vld [vmem:[%s292 + $0x1e8] sm:$0xff]
          %v1445 = vld [vmem:[%s292 + $0x1f0] sm:$0xff]
          %v1446 = vld [vmem:[%s292 + $0x1f8] sm:$0xff]
          %v1447 = vadd.f32 %v1383, %v1319
          %v1448 = vadd.f32 %v1384, %v1320
          %v1449 = vadd.f32 %v1385, %v1321
          %v1450 = vadd.f32 %v1386, %v1322
          %v1451 = vadd.f32 %v1387, %v1323
          %v1452 = vadd.f32 %v1388, %v1324
          %v1453 = vadd.f32 %v1389, %v1325
          %v1454 = vadd.f32 %v1390, %v1326
          %v1455 = vadd.f32 %v1391, %v1327
          %v1456 = vadd.f32 %v1392, %v1328
          %v1457 = vadd.f32 %v1393, %v1329
          %v1458 = vadd.f32 %v1394, %v1330
          %v1459 = vadd.f32 %v1395, %v1331
          %v1460 = vadd.f32 %v1396, %v1332
          %v1461 = vadd.f32 %v1397, %v1333
          %v1462 = vadd.f32 %v1398, %v1334
          %v1463 = vadd.f32 %v1399, %v1335
          %v1464 = vadd.f32 %v1400, %v1336
          %v1465 = vadd.f32 %v1401, %v1337
          %v1466 = vadd.f32 %v1402, %v1338
          %v1467 = vadd.f32 %v1403, %v1339
          %v1468 = vadd.f32 %v1404, %v1340
          %v1469 = vadd.f32 %v1405, %v1341
          %v1470 = vadd.f32 %v1406, %v1342
          %v1471 = vadd.f32 %v1407, %v1343
          %v1472 = vadd.f32 %v1408, %v1344
          %v1473 = vadd.f32 %v1409, %v1345
          %v1474 = vadd.f32 %v1410, %v1346
          %v1475 = vadd.f32 %v1411, %v1347
          %v1476 = vadd.f32 %v1412, %v1348
          %v1477 = vadd.f32 %v1413, %v1349
          %v1478 = vadd.f32 %v1414, %v1350
          %v1479 = vadd.f32 %v1415, %v1351
          %v1480 = vadd.f32 %v1416, %v1352
          %v1481 = vadd.f32 %v1417, %v1353
          %v1482 = vadd.f32 %v1418, %v1354
          %v1483 = vadd.f32 %v1419, %v1355
          %v1484 = vadd.f32 %v1420, %v1356
          %v1485 = vadd.f32 %v1421, %v1357
          %v1486 = vadd.f32 %v1422, %v1358
          %v1487 = vadd.f32 %v1423, %v1359
          %v1488 = vadd.f32 %v1424, %v1360
          %v1489 = vadd.f32 %v1425, %v1361
          %v1490 = vadd.f32 %v1426, %v1362
          %v1491 = vadd.f32 %v1427, %v1363
          %v1492 = vadd.f32 %v1428, %v1364
          %v1493 = vadd.f32 %v1429, %v1365
          %v1494 = vadd.f32 %v1430, %v1366
          %v1495 = vadd.f32 %v1431, %v1367
          %v1496 = vadd.f32 %v1432, %v1368
          %v1497 = vadd.f32 %v1433, %v1369
          %v1498 = vadd.f32 %v1434, %v1370
          %v1499 = vadd.f32 %v1435, %v1371
          %v1500 = vadd.f32 %v1436, %v1372
          %v1501 = vadd.f32 %v1437, %v1373
          %v1502 = vadd.f32 %v1438, %v1374
          %v1503 = vadd.f32 %v1439, %v1375
          %v1504 = vadd.f32 %v1440, %v1376
          %v1505 = vadd.f32 %v1441, %v1377
          %v1506 = vadd.f32 %v1442, %v1378
          %v1507 = vadd.f32 %v1443, %v1379
          %v1508 = vadd.f32 %v1444, %v1380
          %v1509 = vadd.f32 %v1445, %v1381
          %v1510 = vadd.f32 %v1446, %v1382
          %1511 = vst [vmem:[%s325] sm:$0xff] %v1447
          %1512 = vst [vmem:[%s325 + $0x8] sm:$0xff] %v1448
          %1513 = vst [vmem:[%s325 + $0x10] sm:$0xff] %v1449
          %1514 = vst [vmem:[%s325 + $0x18] sm:$0xff] %v1450
          %1515 = vst [vmem:[%s325 + $0x20] sm:$0xff] %v1451
          %1516 = vst [vmem:[%s325 + $0x28] sm:$0xff] %v1452
          %1517 = vst [vmem:[%s325 + $0x30] sm:$0xff] %v1453
          %1518 = vst [vmem:[%s325 + $0x38] sm:$0xff] %v1454
          %1519 = vst [vmem:[%s325 + $0x40] sm:$0xff] %v1455
          %1520 = vst [vmem:[%s325 + $0x48] sm:$0xff] %v1456
          %1521 = vst [vmem:[%s325 + $0x50] sm:$0xff] %v1457
          %1522 = vst [vmem:[%s325 + $0x58] sm:$0xff] %v1458
          %1523 = vst [vmem:[%s325 + $0x60] sm:$0xff] %v1459
          %1524 = vst [vmem:[%s325 + $0x68] sm:$0xff] %v1460
          %1525 = vst [vmem:[%s325 + $0x70] sm:$0xff] %v1461
          %1526 = vst [vmem:[%s325 + $0x78] sm:$0xff] %v1462
          %1527 = vst [vmem:[%s325 + $0x80] sm:$0xff] %v1463
          %1528 = vst [vmem:[%s325 + $0x88] sm:$0xff] %v1464
          %1529 = vst [vmem:[%s325 + $0x90] sm:$0xff] %v1465
          %1530 = vst [vmem:[%s325 + $0x98] sm:$0xff] %v1466
          %1531 = vst [vmem:[%s325 + $0xa0] sm:$0xff] %v1467
          %1532 = vst [vmem:[%s325 + $0xa8] sm:$0xff] %v1468
          %1533 = vst [vmem:[%s325 + $0xb0] sm:$0xff] %v1469
          %1534 = vst [vmem:[%s325 + $0xb8] sm:$0xff] %v1470
          %1535 = vst [vmem:[%s325 + $0xc0] sm:$0xff] %v1471
          %1536 = vst [vmem:[%s325 + $0xc8] sm:$0xff] %v1472
          %1537 = vst [vmem:[%s325 + $0xd0] sm:$0xff] %v1473
          %1538 = vst [vmem:[%s325 + $0xd8] sm:$0xff] %v1474
          %1539 = vst [vmem:[%s325 + $0xe0] sm:$0xff] %v1475
          %1540 = vst [vmem:[%s325 + $0xe8] sm:$0xff] %v1476
          %1541 = vst [vmem:[%s325 + $0xf0] sm:$0xff] %v1477
          %1542 = vst [vmem:[%s325 + $0xf8] sm:$0xff] %v1478
          %1543 = vst [vmem:[%s325 + $0x100] sm:$0xff] %v1479
          %1544 = vst [vmem:[%s325 + $0x108] sm:$0xff] %v1480
          %1545 = vst [vmem:[%s325 + $0x110] sm:$0xff] %v1481
          %1546 = vst [vmem:[%s325 + $0x118] sm:$0xff] %v1482
          %1547 = vst [vmem:[%s325 + $0x120] sm:$0xff] %v1483
          %1548 = vst [vmem:[%s325 + $0x128] sm:$0xff] %v1484
          %1549 = vst [vmem:[%s325 + $0x130] sm:$0xff] %v1485
          %1550 = vst [vmem:[%s325 + $0x138] sm:$0xff] %v1486
          %1551 = vst [vmem:[%s325 + $0x140] sm:$0xff] %v1487
          %1552 = vst [vmem:[%s325 + $0x148] sm:$0xff] %v1488
          %1553 = vst [vmem:[%s325 + $0x150] sm:$0xff] %v1489
          %1554 = vst [vmem:[%s325 + $0x158] sm:$0xff] %v1490
          %1555 = vst [vmem:[%s325 + $0x160] sm:$0xff] %v1491
          %1556 = vst [vmem:[%s325 + $0x168] sm:$0xff] %v1492
          %1557 = vst [vmem:[%s325 + $0x170] sm:$0xff] %v1493
          %1558 = vst [vmem:[%s325 + $0x178] sm:$0xff] %v1494
          %1559 = vst [vmem:[%s325 + $0x180] sm:$0xff] %v1495
          %1560 = vst [vmem:[%s325 + $0x188] sm:$0xff] %v1496
          %1561 = vst [vmem:[%s325 + $0x190] sm:$0xff] %v1497
          %1562 = vst [vmem:[%s325 + $0x198] sm:$0xff] %v1498
          %1563 = vst [vmem:[%s325 + $0x1a0] sm:$0xff] %v1499
          %1564 = vst [vmem:[%s325 + $0x1a8] sm:$0xff] %v1500
          %1565 = vst [vmem:[%s325 + $0x1b0] sm:$0xff] %v1501
          %1566 = vst [vmem:[%s325 + $0x1b8] sm:$0xff] %v1502
          %1567 = vst [vmem:[%s325 + $0x1c0] sm:$0xff] %v1503
          %1568 = vst [vmem:[%s325 + $0x1c8] sm:$0xff] %v1504
          %1569 = vst [vmem:[%s325 + $0x1d0] sm:$0xff] %v1505
          %1570 = vst [vmem:[%s325 + $0x1d8] sm:$0xff] %v1506
          %1571 = vst [vmem:[%s325 + $0x1e0] sm:$0xff] %v1507
          %1572 = vst [vmem:[%s325 + $0x1e8] sm:$0xff] %v1508
          %1573 = vst [vmem:[%s325 + $0x1f0] sm:$0xff] %v1509
          %1574 = vst [vmem:[%s325 + $0x1f8] sm:$0xff] %v1510
        $region56: #{tpu_custom_call.1} parent=35 // pred_fallthru
          _
        %s1575 = sand.u32 %s161, 1
        %s1576 = scalar_lea.sflag [#allocation5], %s1575
        %s1577 = sand.u32 %s161, 1
        %s1578 = smul.addr %s1577, 512
        %s1579 = scalar_lea.vmem [#allocation9], %s1578
        // Predicated region
        $region57: #{tpu_custom_call.1} parent=35 // pred_check
          %p1580 = pneg %p171
        $region58: #{tpu_custom_call.1} parent=35 // pred_check_branch
          %1582 = sbr.rel (%p1580) target = $region60
        $region59: #{tpu_custom_call.1} parent=35 // pred_region
          %s1583 = smul.u32 32, %s27
          %s1584 = smul.u32 2, %s28
          %s1586 = ssub.s32 8192, 8192
          %1587 = vsyncadd %s1576, %s1586
          %s1588 = smul.addr %s1583, 2
          %s1589 = sadd.s32 %s1584, %s1588
          %s1590 = smul.addr %s1589, 128
          %s1591 = scalar_lea.hbm %s4, %s1590
          %s1592 = sshll.u32 %s1579, 4
          %s1593 = int_to_ptr.vmem [resolvable:$true] %s1592
          %1598 = dma.vmem_to_hbm [thread:$0]  %s1593, 8192, %s1591, %s1576, 256, 256, 16
        $region60: #{tpu_custom_call.1} parent=35 // pred_fallthru
          _
      $region36: #{tpu_custom_call.1} parent=5 // pred_fallthru
        _
      %p1599 = scmp.le.s32.totalorder 2, %s17
      // Predicated region
      $region61: #{tpu_custom_call.1} parent=5 // pred_check
        %p1600 = pneg %p1599
      $region62: #{tpu_custom_call.1} parent=5 // pred_check_branch
        %1602 = sbr.rel (%p1600) target = $region64
      $region63: #{tpu_custom_call.1} parent=5 // pred_region
        %s1603 = ssub.s32 %s17, 2
        // Predicated region
        $region65: #{tpu_custom_call.1} parent=63 // pred_check
          %p1604 = pneg %p177
        $region66: #{tpu_custom_call.1} parent=63 // pred_check_branch
          %1606 = sbr.rel (%p1604) target = $region68
        $region67: #{tpu_custom_call.1} parent=63 // pred_region
          %s1607 = sand.u32 %s162, 1
          %s1608 = scalar_lea.sflag [#allocation5], %s1607
          %s1609 = sand.u32 %s162, 1
          %s1610 = smul.addr %s1609, 512
          %s1611 = scalar_lea.vmem [#allocation9], %s1610
          %1612 = dma.done %s1608, 8192
        $region68: #{tpu_custom_call.1} parent=63 // pred_fallthru
          _
      $region64: #{tpu_custom_call.1} parent=5 // pred_fallthru
        _
    $region6: #{tpu_custom_call.1} parent=1 // loop_footer
      %s21 = sadd.s32 1, %s17
    $region7: #{tpu_custom_call.1} parent=1 // loop_footer_branch
      %16 = sbr.rel target = $region3
    $region8: #{tpu_custom_call.1} parent=1 // loop_exit
      _
    %1613 = vsyncpa [#allocation4], 1
    %s1614 = scalar_lea.sflag [#allocation4], 1
    %1615 = vsyncpa %s1614, 1
    %1616 = vsyncpa [#allocation7], 1
    %1617 = vsyncpa [#allocation5], 1
    %s1618 = scalar_lea.sflag [#allocation5], 1
    %1619 = vsyncpa %s1618, 1

</llo_original>
